<compile_context>
chip_gen: v7x
topology: tpu7x:2x2x1
jax: 0.10.0
libtpu: 0.0.40
codegen_flags: <defaults>
</compile_context>

<pallas_src>
import math

import jax
import jax.numpy as jnp
from jax.experimental import pallas as pl
from jax.experimental.pallas import tpu as pltpu

# ---------------- small synthetic BERT config ----------------
VOCAB = 100
TYPE_VOCAB = 2
MAX_POS = 16
HIDDEN = 32          # config.feature_num
NUM_LAYERS = 2
NUM_HEADS = 2
HEAD_DIM = HIDDEN // NUM_HEADS
INTERMEDIATE = 64
LN_EPS = 1e-12
ATTN_SCALE = 1.0 / math.sqrt(HEAD_DIM)


# ---------------- fused encoder kernel ----------------

def _layer_norm(x, gamma, beta):
    mu = jnp.mean(x, axis=-1, keepdims=True)
    var = jnp.mean(jnp.square(x - mu), axis=-1, keepdims=True)
    return (x - mu) * jax.lax.rsqrt(var + LN_EPS) * gamma + beta


def _fused_encoder_kernel(
        emb_ref, bias_ref, emb_g_ref, emb_b_ref,
        wqkv_ref, bqkv_ref, wo_ref, bo_ref, ln1_g_ref, ln1_b_ref,
        w1_ref, b1_ref, w2_ref, b2_ref, ln2_g_ref, ln2_b_ref,
        cls_w_ref, cls_b_ref,
        out_ref,
        x_ref):
    layer = pl.program_id(1)

    # Layer step 0: embedding LayerNorm -> activation scratch (no residual).
    @pl.when(layer == 0)
    def _():
        x_ref[...] = _layer_norm(emb_ref[0], emb_g_ref[...], emb_b_ref[...])

    x = x_ref[...]                                      # (S, H), VMEM-resident

    # ---- self attention ----
    # Fused Q/K/V projection: one (S,H) x (H,3H) MXU pass instead of three.
    qkv = (jnp.dot(x, wqkv_ref[0], preferred_element_type=jnp.float32)
           + bqkv_ref[0])                               # (S, 3H)
    bias = bias_ref[0]                                  # (1, S) additive mask

    ctx_heads = []
    for h in range(NUM_HEADS):                          # static unroll; lane slices
        lo = h * HEAD_DIM
        hi = lo + HEAD_DIM
        q_h = qkv[:, lo:hi]                             # (S, DH)
        k_h = qkv[:, HIDDEN + lo:HIDDEN + hi]
        v_h = qkv[:, 2 * HIDDEN + lo:2 * HIDDEN + hi]
        scores = jax.lax.dot_general(
            q_h, k_h, (((1,), (1,)), ((), ())),
            preferred_element_type=jnp.float32) * ATTN_SCALE   # (S, S)
        scores = scores + bias                          # broadcast over queries
        scores = scores - jnp.max(scores, axis=-1, keepdims=True)
        p = jnp.exp(scores)
        p = p * pl.reciprocal(jnp.sum(p, axis=-1, keepdims=True), approx=True)
        ctx_heads.append(jnp.dot(p, v_h, preferred_element_type=jnp.float32))
    ctx = jnp.concatenate(ctx_heads, axis=-1)           # (S, H)

    attn_out = (jnp.dot(ctx, wo_ref[0], preferred_element_type=jnp.float32)
                + bo_ref[0])
    x = _layer_norm(attn_out + x, ln1_g_ref[0], ln1_b_ref[0])

    # ---- feed-forward ----
    h1 = jnp.dot(x, w1_ref[0], preferred_element_type=jnp.float32) + b1_ref[0]
    # TODO(synk): HF BERT "gelu" is the exact erf form; tanh-approx used here.
    h1 = jax.nn.gelu(h1, approximate=True)
    ffn = jnp.dot(h1, w2_ref[0], preferred_element_type=jnp.float32) + b2_ref[0]
    x = _layer_norm(ffn + x, ln2_g_ref[0], ln2_b_ref[0])

    x_ref[...] = x

    # Last layer step: [CLS] token -> Linear(H, 1) -> Sigmoid.
    @pl.when(layer == pl.num_programs(1) - 1)
    def _():
        cls_tok = x[0:1, :]                             # (1, H)
        logit = (jnp.dot(cls_tok, cls_w_ref[...],
                         preferred_element_type=jnp.float32) + cls_b_ref[...])
        out_ref[0] = jax.nn.sigmoid(logit)


# ---------------- parameters (deterministic synthetic init) ----------------

def init_params(key):
    keys = jax.random.split(key, 4 + NUM_LAYERS)

    def w(k, shape):
        return 0.02 * jax.random.normal(k, shape, jnp.float32)

    wqkv, bqkv, wo, bo = [], [], [], []
    ln1_g, ln1_b, w1, b1 = [], [], [], []
    w2, b2, ln2_g, ln2_b = [], [], [], []
    for i in range(NUM_LAYERS):
        lk = jax.random.split(keys[4 + i], 6)
        wq = w(lk[0], (HIDDEN, HIDDEN))
        wk = w(lk[1], (HIDDEN, HIDDEN))
        wv = w(lk[2], (HIDDEN, HIDDEN))
        wqkv.append(jnp.concatenate([wq, wk, wv], axis=1))        # (H, 3H)
        bqkv.append(jnp.zeros((1, 3 * HIDDEN), jnp.float32))
        wo.append(w(lk[3], (HIDDEN, HIDDEN)))
        bo.append(jnp.zeros((1, HIDDEN), jnp.float32))
        ln1_g.append(jnp.ones((1, HIDDEN), jnp.float32))
        ln1_b.append(jnp.zeros((1, HIDDEN), jnp.float32))
        w1.append(w(lk[4], (HIDDEN, INTERMEDIATE)))
        b1.append(jnp.zeros((1, INTERMEDIATE), jnp.float32))
        w2.append(w(lk[5], (INTERMEDIATE, HIDDEN)))
        b2.append(jnp.zeros((1, HIDDEN), jnp.float32))
        ln2_g.append(jnp.ones((1, HIDDEN), jnp.float32))
        ln2_b.append(jnp.zeros((1, HIDDEN), jnp.float32))

    stack = lambda xs: jnp.stack(xs, axis=0)
    return {
        "word_emb": w(keys[0], (VOCAB, HIDDEN)),
        "pos_emb": w(keys[1], (MAX_POS, HIDDEN)),
        "type_emb": w(keys[2], (TYPE_VOCAB, HIDDEN)),
        "emb_ln_g": jnp.ones((1, HIDDEN), jnp.float32),
        "emb_ln_b": jnp.zeros((1, HIDDEN), jnp.float32),
        "cls_w": w(keys[3], (HIDDEN, 1)),
        "cls_b": jnp.zeros((1, 1), jnp.float32),
        "wqkv": stack(wqkv), "bqkv": stack(bqkv),
        "wo": stack(wo), "bo": stack(bo),
        "ln1_g": stack(ln1_g), "ln1_b": stack(ln1_b),
        "w1": stack(w1), "b1": stack(b1),
        "w2": stack(w2), "b2": stack(b2),
        "ln2_g": stack(ln2_g), "ln2_b": stack(ln2_b),
    }


# ---------------- forward ----------------

def bert_text_match_forward(params, input_ids, token_type_ids, attention_mask):
    B, S = input_ids.shape

    # Embedding table gathers are plain-JAX glue; LN happens inside the kernel.
    emb = (params["word_emb"][input_ids]
           + params["pos_emb"][jnp.arange(S)][None, :, :]
           + params["type_emb"][token_type_ids]).astype(jnp.float32)
    # Additive attention-mask bias, kept in f32: (B, 1, S).
    bias = ((1.0 - attention_mask.astype(jnp.float32)) * -10000.0).reshape(B, 1, S)

    def batch_spec(*dims):
        zeros = (0,) * len(dims)
        return pl.BlockSpec((1,) + dims, lambda b, l: (b,) + zeros)

    def layer_spec(*dims):
        zeros = (0,) * len(dims)
        return pl.BlockSpec((1,) + dims, lambda b, l: (l,) + zeros)

    def shared_spec(*dims):
        zeros = (0,) * len(dims)
        return pl.BlockSpec(dims, lambda b, l: zeros)

    out = pl.pallas_call(
        _fused_encoder_kernel,
        grid=(B, NUM_LAYERS),
        in_specs=[
            batch_spec(S, HIDDEN),                 # emb
            batch_spec(1, S),                      # mask bias
            shared_spec(1, HIDDEN),                # emb_ln_g
            shared_spec(1, HIDDEN),                # emb_ln_b
            layer_spec(HIDDEN, 3 * HIDDEN),        # wqkv
            layer_spec(1, 3 * HIDDEN),             # bqkv
            layer_spec(HIDDEN, HIDDEN),            # wo
            layer_spec(1, HIDDEN),                 # bo
            layer_spec(1, HIDDEN),                 # ln1_g
            layer_spec(1, HIDDEN),                 # ln1_b
            layer_spec(HIDDEN, INTERMEDIATE),      # w1
            layer_spec(1, INTERMEDIATE),           # b1
            layer_spec(INTERMEDIATE, HIDDEN),      # w2
            layer_spec(1, HIDDEN),                 # b2
            layer_spec(1, HIDDEN),                 # ln2_g
            layer_spec(1, HIDDEN),                 # ln2_b
            shared_spec(HIDDEN, 1),                # cls_w
            shared_spec(1, 1),                     # cls_b
        ],
        out_specs=pl.BlockSpec((1, 1, 1), lambda b, l: (b, 0, 0)),
        out_shape=jax.ShapeDtypeStruct((B, 1, 1), jnp.float32),
        scratch_shapes=[pltpu.VMEM((S, HIDDEN), jnp.float32)],
        compiler_params=pltpu.CompilerParams(
            dimension_semantics=("parallel", "arbitrary")),
    )(emb, bias, params["emb_ln_g"], params["emb_ln_b"],
      params["wqkv"], params["bqkv"], params["wo"], params["bo"],
      params["ln1_g"], params["ln1_b"],
      params["w1"], params["b1"], params["w2"], params["b2"],
      params["ln2_g"], params["ln2_b"],
      params["cls_w"], params["cls_b"])

    return out.reshape(B, 1)


# ---------------- demo ----------------

if __name__ == "__main__":
    key = jax.random.PRNGKey(0)
    pkey, ikey = jax.random.split(key)
    params = init_params(pkey)

    B, S = 2, 8
    input_ids = jax.random.randint(ikey, (B, S), 0, VOCAB, dtype=jnp.int32)
    token_type_ids = jnp.concatenate(
        [jnp.zeros((B, S // 2), jnp.int32), jnp.ones((B, S // 2), jnp.int32)],
        axis=1)
    attention_mask = jnp.ones((B, S), jnp.int32).at[1, S - 2:].set(0)

    out = jax.jit(bert_text_match_forward)(
        params, input_ids, token_type_ids, attention_mask)
    jax.block_until_ready(out)

    assert out.shape == (B, 1)
    assert bool(jnp.all((out >= 0.0) & (out <= 1.0)))
    print("KERNEL_OK")
</pallas_src>

<mosaic_0001>
module attributes {stable_mosaic.version = 11 : i64} {
  func.func @_fused_encoder_kernel(%arg0: i32, %arg1: i32, %arg2: memref<1x8x32xf32, #tpu.memory_space<vmem>>, %arg3: memref<1x1x8xf32, #tpu.memory_space<vmem>>, %arg4: memref<1x32xf32, #tpu.memory_space<vmem>>, %arg5: memref<1x32xf32, #tpu.memory_space<vmem>>, %arg6: memref<1x32x96xf32, #tpu.memory_space<vmem>>, %arg7: memref<1x1x96xf32, #tpu.memory_space<vmem>>, %arg8: memref<1x32x32xf32, #tpu.memory_space<vmem>>, %arg9: memref<1x1x32xf32, #tpu.memory_space<vmem>>, %arg10: memref<1x1x32xf32, #tpu.memory_space<vmem>>, %arg11: memref<1x1x32xf32, #tpu.memory_space<vmem>>, %arg12: memref<1x32x64xf32, #tpu.memory_space<vmem>>, %arg13: memref<1x1x64xf32, #tpu.memory_space<vmem>>, %arg14: memref<1x64x32xf32, #tpu.memory_space<vmem>>, %arg15: memref<1x1x32xf32, #tpu.memory_space<vmem>>, %arg16: memref<1x1x32xf32, #tpu.memory_space<vmem>>, %arg17: memref<1x1x32xf32, #tpu.memory_space<vmem>>, %arg18: memref<32x1xf32, #tpu.memory_space<vmem>>, %arg19: memref<1x1xf32, #tpu.memory_space<vmem>>, %arg20: memref<1x1x1xf32, #tpu.memory_space<vmem>>, %arg21: memref<8x32xf32, #tpu.memory_space<vmem>>) attributes {dimension_semantics = [#tpu.dimension_semantics<parallel>, #tpu.dimension_semantics<arbitrary>], iteration_bounds = array<i64: 2, 2>, scalar_prefetch = 0 : i64, scratch_operands = 1 : i64, tpu.core_type = #tpu.core_type<tc>, window_params = [{transform_indices = @transform_0, window_bounds = array<i64: 1, 8, 32>}, {transform_indices = @transform_1, window_bounds = array<i64: 1, 1, 8>}, {pipeline_mode = #tpu.pipeline_mode<synchronous>, transform_indices = @transform_2, window_bounds = array<i64: 1, 32>}, {pipeline_mode = #tpu.pipeline_mode<synchronous>, transform_indices = @transform_3, window_bounds = array<i64: 1, 32>}, {transform_indices = @transform_4, window_bounds = array<i64: 1, 32, 96>}, {transform_indices = @transform_5, window_bounds = array<i64: 1, 1, 96>}, {transform_indices = @transform_6, window_bounds = array<i64: 1, 32, 32>}, {transform_indices = @transform_7, window_bounds = array<i64: 1, 1, 32>}, {transform_indices = @transform_8, window_bounds = array<i64: 1, 1, 32>}, {transform_indices = @transform_9, window_bounds = array<i64: 1, 1, 32>}, {transform_indices = @transform_10, window_bounds = array<i64: 1, 32, 64>}, {transform_indices = @transform_11, window_bounds = array<i64: 1, 1, 64>}, {transform_indices = @transform_12, window_bounds = array<i64: 1, 64, 32>}, {transform_indices = @transform_13, window_bounds = array<i64: 1, 1, 32>}, {transform_indices = @transform_14, window_bounds = array<i64: 1, 1, 32>}, {transform_indices = @transform_15, window_bounds = array<i64: 1, 1, 32>}, {pipeline_mode = #tpu.pipeline_mode<synchronous>, transform_indices = @transform_16, window_bounds = array<i64: 32, 1>}, {pipeline_mode = #tpu.pipeline_mode<synchronous>, transform_indices = @transform_17, window_bounds = array<i64: 1, 1>}, {transform_indices = @transform_18, window_bounds = array<i64: 1, 1, 1>}]} {
    %c0_i32 = arith.constant 0 : i32
    %0 = arith.cmpi eq, %arg1, %c0_i32 : i32
    %1 = arith.extui %0 : i1 to i32
    %c0_i32_0 = arith.constant 0 : i32
    %2 = arith.cmpi ne, %1, %c0_i32_0 : i32
    scf.if %2 {
      %c0_71 = arith.constant 0 : index
      %c0_72 = arith.constant 0 : index
      %c0_73 = arith.constant 0 : index
      %144 = vector.load %arg2[%c0_71, %c0_72, %c0_73] : memref<1x8x32xf32, #tpu.memory_space<vmem>>, vector<1x8x32xf32>
      %145 = vector.shape_cast %144 : vector<1x8x32xf32> to vector<8x32xf32>
      %c0_74 = arith.constant 0 : index
      %c0_75 = arith.constant 0 : index
      %146 = vector.load %arg4[%c0_74, %c0_75] : memref<1x32xf32, #tpu.memory_space<vmem>>, vector<1x32xf32>
      %c0_76 = arith.constant 0 : index
      %c0_77 = arith.constant 0 : index
      %147 = vector.load %arg5[%c0_76, %c0_77] : memref<1x32xf32, #tpu.memory_space<vmem>>, vector<1x32xf32>
      %cst_78 = arith.constant dense<0.000000e+00> : vector<8xf32>
      %148 = vector.multi_reduction <add>, %145, %cst_78 [1] : vector<8x32xf32> to vector<8xf32>
      %149 = vector.shape_cast %148 : vector<8xf32> to vector<8x1xf32>
      %cst_79 = arith.constant 3.200000e+01 : f32
      %150 = vector.broadcast %cst_79 : f32 to vector<8x1xf32>
      %151 = arith.divf %149, %150 : vector<8x1xf32>
      %152 = vector.broadcast %151 : vector<8x1xf32> to vector<8x32xf32>
      %153 = arith.subf %145, %152 : vector<8x32xf32>
      %154 = arith.mulf %153, %153 : vector<8x32xf32>
      %cst_80 = arith.constant dense<0.000000e+00> : vector<8xf32>
      %155 = vector.multi_reduction <add>, %154, %cst_80 [1] : vector<8x32xf32> to vector<8xf32>
      %156 = vector.shape_cast %155 : vector<8xf32> to vector<8x1xf32>
      %cst_81 = arith.constant 3.200000e+01 : f32
      %157 = vector.broadcast %cst_81 : f32 to vector<8x1xf32>
      %158 = arith.divf %156, %157 : vector<8x1xf32>
      %159 = vector.broadcast %151 : vector<8x1xf32> to vector<8x32xf32>
      %160 = arith.subf %145, %159 : vector<8x32xf32>
      %cst_82 = arith.constant 9.99999996E-13 : f32
      %161 = vector.broadcast %cst_82 : f32 to vector<8x1xf32>
      %162 = arith.addf %158, %161 : vector<8x1xf32>
      %163 = math.rsqrt %162 : vector<8x1xf32>
      %164 = vector.broadcast %163 : vector<8x1xf32> to vector<8x32xf32>
      %165 = arith.mulf %160, %164 : vector<8x32xf32>
      %166 = vector.broadcast %146 : vector<1x32xf32> to vector<8x32xf32>
      %167 = arith.mulf %165, %166 : vector<8x32xf32>
      %168 = vector.broadcast %147 : vector<1x32xf32> to vector<8x32xf32>
      %169 = arith.addf %167, %168 : vector<8x32xf32>
      %c0_83 = arith.constant 0 : index
      %c0_84 = arith.constant 0 : index
      %170 = vector.load %arg21[%c0_83, %c0_84] : memref<8x32xf32, #tpu.memory_space<vmem>>, vector<8x32xf32>
      tpu.vector_store %arg21[%c0_83, %c0_84], %169 {strides = array<i32>} : memref<8x32xf32, #tpu.memory_space<vmem>>, vector<8x32xf32>,
    } else {
    }
    %c0 = arith.constant 0 : index
    %c0_1 = arith.constant 0 : index
    %3 = vector.load %arg21[%c0, %c0_1] : memref<8x32xf32, #tpu.memory_space<vmem>>, vector<8x32xf32>
    %c0_2 = arith.constant 0 : index
    %c0_3 = arith.constant 0 : index
    %c0_4 = arith.constant 0 : index
    %4 = vector.load %arg6[%c0_2, %c0_3, %c0_4] : memref<1x32x96xf32, #tpu.memory_space<vmem>>, vector<1x32x96xf32>
    %5 = vector.shape_cast %4 : vector<1x32x96xf32> to vector<32x96xf32>
    %cst = arith.constant dense<0.000000e+00> : vector<8x96xf32>
    %6 = tpu.matmul %3, %5, %cst {dimension_numbers = #tpu.dot_dimension_numbers<[1], [0], [0], [1], [0, 0, 1, 1], [], []>} : vector<8x32xf32>, vector<32x96xf32>, vector<8x96xf32> -> vector<8x96xf32>
    %c0_5 = arith.constant 0 : index
    %c0_6 = arith.constant 0 : index
    %c0_7 = arith.constant 0 : index
    %7 = vector.load %arg7[%c0_5, %c0_6, %c0_7] : memref<1x1x96xf32, #tpu.memory_space<vmem>>, vector<1x1x96xf32>
    %8 = vector.shape_cast %7 : vector<1x1x96xf32> to vector<1x96xf32>
    %9 = vector.broadcast %8 : vector<1x96xf32> to vector<8x96xf32>
    %10 = arith.addf %6, %9 : vector<8x96xf32>
    %c0_8 = arith.constant 0 : index
    %c0_9 = arith.constant 0 : index
    %c0_10 = arith.constant 0 : index
    %11 = vector.load %arg3[%c0_8, %c0_9, %c0_10] : memref<1x1x8xf32, #tpu.memory_space<vmem>>, vector<1x1x8xf32>
    %12 = vector.shape_cast %11 : vector<1x1x8xf32> to vector<1x8xf32>
    %13 = vector.extract_strided_slice %10 {offsets = [0, 0], sizes = [8, 16], strides = [1, 1]} : vector<8x96xf32> to vector<8x16xf32>
    %14 = vector.extract_strided_slice %10 {offsets = [0, 32], sizes = [8, 16], strides = [1, 1]} : vector<8x96xf32> to vector<8x16xf32>
    %15 = vector.extract_strided_slice %10 {offsets = [0, 64], sizes = [8, 16], strides = [1, 1]} : vector<8x96xf32> to vector<8x16xf32>
    %cst_11 = arith.constant dense<0.000000e+00> : vector<8x8xf32>
    %16 = tpu.matmul %13, %14, %cst_11 {dimension_numbers = #tpu.dot_dimension_numbers<[1], [1], [0], [0], [0, 0, 1, 0], [], []>} : vector<8x16xf32>, vector<8x16xf32>, vector<8x8xf32> -> vector<8x8xf32>
    %cst_12 = arith.constant 2.500000e-01 : f32
    %17 = vector.broadcast %cst_12 : f32 to vector<8x8xf32>
    %18 = arith.mulf %16, %17 : vector<8x8xf32>
    %19 = vector.broadcast %12 : vector<1x8xf32> to vector<8x8xf32>
    %20 = arith.addf %18, %19 : vector<8x8xf32>
    %cst_13 = arith.constant dense<0xFF800000> : vector<8xf32>
    %21 = vector.multi_reduction <maximumf>, %20, %cst_13 [1] : vector<8x8xf32> to vector<8xf32>
    %22 = vector.shape_cast %21 : vector<8xf32> to vector<8x1xf32>
    %23 = vector.broadcast %22 : vector<8x1xf32> to vector<8x8xf32>
    %24 = arith.subf %20, %23 : vector<8x8xf32>
    %25 = math.exp %24 : vector<8x8xf32>
    %cst_14 = arith.constant dense<0.000000e+00> : vector<8xf32>
    %26 = vector.multi_reduction <add>, %25, %cst_14 [1] : vector<8x8xf32> to vector<8xf32>
    %27 = vector.shape_cast %26 : vector<8xf32> to vector<8x1xf32>
    %28 = tpu.reciprocal %27 {approx = true} : vector<8x1xf32> -> vector<8x1xf32>
    %29 = vector.broadcast %28 : vector<8x1xf32> to vector<8x8xf32>
    %30 = arith.mulf %25, %29 : vector<8x8xf32>
    %cst_15 = arith.constant dense<0.000000e+00> : vector<8x16xf32>
    %31 = tpu.matmul %30, %15, %cst_15 {dimension_numbers = #tpu.dot_dimension_numbers<[1], [0], [0], [1], [0, 0, 1, 1], [], []>} : vector<8x8xf32>, vector<8x16xf32>, vector<8x16xf32> -> vector<8x16xf32>
    %32 = vector.extract_strided_slice %10 {offsets = [0, 16], sizes = [8, 16], strides = [1, 1]} : vector<8x96xf32> to vector<8x16xf32>
    %33 = vector.extract_strided_slice %10 {offsets = [0, 48], sizes = [8, 16], strides = [1, 1]} : vector<8x96xf32> to vector<8x16xf32>
    %34 = vector.extract_strided_slice %10 {offsets = [0, 80], sizes = [8, 16], strides = [1, 1]} : vector<8x96xf32> to vector<8x16xf32>
    %cst_16 = arith.constant dense<0.000000e+00> : vector<8x8xf32>
    %35 = tpu.matmul %32, %33, %cst_16 {dimension_numbers = #tpu.dot_dimension_numbers<[1], [1], [0], [0], [0, 0, 1, 0], [], []>} : vector<8x16xf32>, vector<8x16xf32>, vector<8x8xf32> -> vector<8x8xf32>
    %cst_17 = arith.constant 2.500000e-01 : f32
    %36 = vector.broadcast %cst_17 : f32 to vector<8x8xf32>
    %37 = arith.mulf %35, %36 : vector<8x8xf32>
    %38 = vector.broadcast %12 : vector<1x8xf32> to vector<8x8xf32>
    %39 = arith.addf %37, %38 : vector<8x8xf32>
    %cst_18 = arith.constant dense<0xFF800000> : vector<8xf32>
    %40 = vector.multi_reduction <maximumf>, %39, %cst_18 [1] : vector<8x8xf32> to vector<8xf32>
    %41 = vector.shape_cast %40 : vector<8xf32> to vector<8x1xf32>
    %42 = vector.broadcast %41 : vector<8x1xf32> to vector<8x8xf32>
    %43 = arith.subf %39, %42 : vector<8x8xf32>
    %44 = math.exp %43 : vector<8x8xf32>
    %cst_19 = arith.constant dense<0.000000e+00> : vector<8xf32>
    %45 = vector.multi_reduction <add>, %44, %cst_19 [1] : vector<8x8xf32> to vector<8xf32>
    %46 = vector.shape_cast %45 : vector<8xf32> to vector<8x1xf32>
    %47 = tpu.reciprocal %46 {approx = true} : vector<8x1xf32> -> vector<8x1xf32>
    %48 = vector.broadcast %47 : vector<8x1xf32> to vector<8x8xf32>
    %49 = arith.mulf %44, %48 : vector<8x8xf32>
    %cst_20 = arith.constant dense<0.000000e+00> : vector<8x16xf32>
    %50 = tpu.matmul %49, %34, %cst_20 {dimension_numbers = #tpu.dot_dimension_numbers<[1], [0], [0], [1], [0, 0, 1, 1], [], []>} : vector<8x8xf32>, vector<8x16xf32>, vector<8x16xf32> -> vector<8x16xf32>
    %51 = tpu.concatenate %31, %50 in 1 : vector<8x16xf32>, vector<8x16xf32> -> vector<8x32xf32>
    %c0_21 = arith.constant 0 : index
    %c0_22 = arith.constant 0 : index
    %c0_23 = arith.constant 0 : index
    %52 = vector.load %arg8[%c0_21, %c0_22, %c0_23] : memref<1x32x32xf32, #tpu.memory_space<vmem>>, vector<1x32x32xf32>
    %53 = vector.shape_cast %52 : vector<1x32x32xf32> to vector<32x32xf32>
    %cst_24 = arith.constant dense<0.000000e+00> : vector<8x32xf32>
    %54 = tpu.matmul %51, %53, %cst_24 {dimension_numbers = #tpu.dot_dimension_numbers<[1], [0], [0], [1], [0, 0, 1, 1], [], []>} : vector<8x32xf32>, vector<32x32xf32>, vector<8x32xf32> -> vector<8x32xf32>
    %c0_25 = arith.constant 0 : index
    %c0_26 = arith.constant 0 : index
    %c0_27 = arith.constant 0 : index
    %55 = vector.load %arg9[%c0_25, %c0_26, %c0_27] : memref<1x1x32xf32, #tpu.memory_space<vmem>>, vector<1x1x32xf32>
    %56 = vector.shape_cast %55 : vector<1x1x32xf32> to vector<1x32xf32>
    %57 = vector.broadcast %56 : vector<1x32xf32> to vector<8x32xf32>
    %58 = arith.addf %54, %57 : vector<8x32xf32>
    %59 = arith.addf %58, %3 : vector<8x32xf32>
    %c0_28 = arith.constant 0 : index
    %c0_29 = arith.constant 0 : index
    %c0_30 = arith.constant 0 : index
    %60 = vector.load %arg10[%c0_28, %c0_29, %c0_30] : memref<1x1x32xf32, #tpu.memory_space<vmem>>, vector<1x1x32xf32>
    %61 = vector.shape_cast %60 : vector<1x1x32xf32> to vector<1x32xf32>
    %c0_31 = arith.constant 0 : index
    %c0_32 = arith.constant 0 : index
    %c0_33 = arith.constant 0 : index
    %62 = vector.load %arg11[%c0_31, %c0_32, %c0_33] : memref<1x1x32xf32, #tpu.memory_space<vmem>>, vector<1x1x32xf32>
    %63 = vector.shape_cast %62 : vector<1x1x32xf32> to vector<1x32xf32>
    %cst_34 = arith.constant dense<0.000000e+00> : vector<8xf32>
    %64 = vector.multi_reduction <add>, %59, %cst_34 [1] : vector<8x32xf32> to vector<8xf32>
    %65 = vector.shape_cast %64 : vector<8xf32> to vector<8x1xf32>
    %cst_35 = arith.constant 3.200000e+01 : f32
    %66 = vector.broadcast %cst_35 : f32 to vector<8x1xf32>
    %67 = arith.divf %65, %66 : vector<8x1xf32>
    %68 = vector.broadcast %67 : vector<8x1xf32> to vector<8x32xf32>
    %69 = arith.subf %59, %68 : vector<8x32xf32>
    %70 = arith.mulf %69, %69 : vector<8x32xf32>
    %cst_36 = arith.constant dense<0.000000e+00> : vector<8xf32>
    %71 = vector.multi_reduction <add>, %70, %cst_36 [1] : vector<8x32xf32> to vector<8xf32>
    %72 = vector.shape_cast %71 : vector<8xf32> to vector<8x1xf32>
    %cst_37 = arith.constant 3.200000e+01 : f32
    %73 = vector.broadcast %cst_37 : f32 to vector<8x1xf32>
    %74 = arith.divf %72, %73 : vector<8x1xf32>
    %75 = vector.broadcast %67 : vector<8x1xf32> to vector<8x32xf32>
    %76 = arith.subf %59, %75 : vector<8x32xf32>
    %cst_38 = arith.constant 9.99999996E-13 : f32
    %77 = vector.broadcast %cst_38 : f32 to vector<8x1xf32>
    %78 = arith.addf %74, %77 : vector<8x1xf32>
    %79 = math.rsqrt %78 : vector<8x1xf32>
    %80 = vector.broadcast %79 : vector<8x1xf32> to vector<8x32xf32>
    %81 = arith.mulf %76, %80 : vector<8x32xf32>
    %82 = vector.broadcast %61 : vector<1x32xf32> to vector<8x32xf32>
    %83 = arith.mulf %81, %82 : vector<8x32xf32>
    %84 = vector.broadcast %63 : vector<1x32xf32> to vector<8x32xf32>
    %85 = arith.addf %83, %84 : vector<8x32xf32>
    %c0_39 = arith.constant 0 : index
    %c0_40 = arith.constant 0 : index
    %c0_41 = arith.constant 0 : index
    %86 = vector.load %arg12[%c0_39, %c0_40, %c0_41] : memref<1x32x64xf32, #tpu.memory_space<vmem>>, vector<1x32x64xf32>
    %87 = vector.shape_cast %86 : vector<1x32x64xf32> to vector<32x64xf32>
    %cst_42 = arith.constant dense<0.000000e+00> : vector<8x64xf32>
    %88 = tpu.matmul %85, %87, %cst_42 {dimension_numbers = #tpu.dot_dimension_numbers<[1], [0], [0], [1], [0, 0, 1, 1], [], []>} : vector<8x32xf32>, vector<32x64xf32>, vector<8x64xf32> -> vector<8x64xf32>
    %c0_43 = arith.constant 0 : index
    %c0_44 = arith.constant 0 : index
    %c0_45 = arith.constant 0 : index
    %89 = vector.load %arg13[%c0_43, %c0_44, %c0_45] : memref<1x1x64xf32, #tpu.memory_space<vmem>>, vector<1x1x64xf32>
    %90 = vector.shape_cast %89 : vector<1x1x64xf32> to vector<1x64xf32>
    %91 = vector.broadcast %90 : vector<1x64xf32> to vector<8x64xf32>
    %92 = arith.addf %88, %91 : vector<8x64xf32>
    %93 = arith.mulf %92, %92 : vector<8x64xf32>
    %94 = arith.mulf %92, %93 : vector<8x64xf32>
    %cst_46 = arith.constant 4.471500e-02 : f32
    %95 = vector.broadcast %cst_46 : f32 to vector<8x64xf32>
    %96 = arith.mulf %95, %94 : vector<8x64xf32>
    %97 = arith.addf %92, %96 : vector<8x64xf32>
    %cst_47 = arith.constant 0.797884583 : f32
    %98 = vector.broadcast %cst_47 : f32 to vector<8x64xf32>
    %99 = arith.mulf %98, %97 : vector<8x64xf32>
    %100 = math.tanh %99 : vector<8x64xf32>
    %cst_48 = arith.constant 1.000000e+00 : f32
    %101 = vector.broadcast %cst_48 : f32 to vector<8x64xf32>
    %102 = arith.addf %101, %100 : vector<8x64xf32>
    %cst_49 = arith.constant 5.000000e-01 : f32
    %103 = vector.broadcast %cst_49 : f32 to vector<8x64xf32>
    %104 = arith.mulf %103, %102 : vector<8x64xf32>
    %105 = arith.mulf %92, %104 : vector<8x64xf32>
    %c0_50 = arith.constant 0 : index
    %c0_51 = arith.constant 0 : index
    %c0_52 = arith.constant 0 : index
    %106 = vector.load %arg14[%c0_50, %c0_51, %c0_52] : memref<1x64x32xf32, #tpu.memory_space<vmem>>, vector<1x64x32xf32>
    %107 = vector.shape_cast %106 : vector<1x64x32xf32> to vector<64x32xf32>
    %cst_53 = arith.constant dense<0.000000e+00> : vector<8x32xf32>
    %108 = tpu.matmul %105, %107, %cst_53 {dimension_numbers = #tpu.dot_dimension_numbers<[1], [0], [0], [1], [0, 0, 1, 1], [], []>} : vector<8x64xf32>, vector<64x32xf32>, vector<8x32xf32> -> vector<8x32xf32>
    %c0_54 = arith.constant 0 : index
    %c0_55 = arith.constant 0 : index
    %c0_56 = arith.constant 0 : index
    %109 = vector.load %arg15[%c0_54, %c0_55, %c0_56] : memref<1x1x32xf32, #tpu.memory_space<vmem>>, vector<1x1x32xf32>
    %110 = vector.shape_cast %109 : vector<1x1x32xf32> to vector<1x32xf32>
    %111 = vector.broadcast %110 : vector<1x32xf32> to vector<8x32xf32>
    %112 = arith.addf %108, %111 : vector<8x32xf32>
    %113 = arith.addf %112, %85 : vector<8x32xf32>
    %c0_57 = arith.constant 0 : index
    %c0_58 = arith.constant 0 : index
    %c0_59 = arith.constant 0 : index
    %114 = vector.load %arg16[%c0_57, %c0_58, %c0_59] : memref<1x1x32xf32, #tpu.memory_space<vmem>>, vector<1x1x32xf32>
    %115 = vector.shape_cast %114 : vector<1x1x32xf32> to vector<1x32xf32>
    %c0_60 = arith.constant 0 : index
    %c0_61 = arith.constant 0 : index
    %c0_62 = arith.constant 0 : index
    %116 = vector.load %arg17[%c0_60, %c0_61, %c0_62] : memref<1x1x32xf32, #tpu.memory_space<vmem>>, vector<1x1x32xf32>
    %117 = vector.shape_cast %116 : vector<1x1x32xf32> to vector<1x32xf32>
    %cst_63 = arith.constant dense<0.000000e+00> : vector<8xf32>
    %118 = vector.multi_reduction <add>, %113, %cst_63 [1] : vector<8x32xf32> to vector<8xf32>
    %119 = vector.shape_cast %118 : vector<8xf32> to vector<8x1xf32>
    %cst_64 = arith.constant 3.200000e+01 : f32
    %120 = vector.broadcast %cst_64 : f32 to vector<8x1xf32>
    %121 = arith.divf %119, %120 : vector<8x1xf32>
    %122 = vector.broadcast %121 : vector<8x1xf32> to vector<8x32xf32>
    %123 = arith.subf %113, %122 : vector<8x32xf32>
    %124 = arith.mulf %123, %123 : vector<8x32xf32>
    %cst_65 = arith.constant dense<0.000000e+00> : vector<8xf32>
    %125 = vector.multi_reduction <add>, %124, %cst_65 [1] : vector<8x32xf32> to vector<8xf32>
    %126 = vector.shape_cast %125 : vector<8xf32> to vector<8x1xf32>
    %cst_66 = arith.constant 3.200000e+01 : f32
    %127 = vector.broadcast %cst_66 : f32 to vector<8x1xf32>
    %128 = arith.divf %126, %127 : vector<8x1xf32>
    %129 = vector.broadcast %121 : vector<8x1xf32> to vector<8x32xf32>
    %130 = arith.subf %113, %129 : vector<8x32xf32>
    %cst_67 = arith.constant 9.99999996E-13 : f32
    %131 = vector.broadcast %cst_67 : f32 to vector<8x1xf32>
    %132 = arith.addf %128, %131 : vector<8x1xf32>
    %133 = math.rsqrt %132 : vector<8x1xf32>
    %134 = vector.broadcast %133 : vector<8x1xf32> to vector<8x32xf32>
    %135 = arith.mulf %130, %134 : vector<8x32xf32>
    %136 = vector.broadcast %115 : vector<1x32xf32> to vector<8x32xf32>
    %137 = arith.mulf %135, %136 : vector<8x32xf32>
    %138 = vector.broadcast %117 : vector<1x32xf32> to vector<8x32xf32>
    %139 = arith.addf %137, %138 : vector<8x32xf32>
    %c0_68 = arith.constant 0 : index
    %c0_69 = arith.constant 0 : index
    %140 = vector.load %arg21[%c0_68, %c0_69] : memref<8x32xf32, #tpu.memory_space<vmem>>, vector<8x32xf32>
    tpu.vector_store %arg21[%c0_68, %c0_69], %139 {strides = array<i32>} : memref<8x32xf32, #tpu.memory_space<vmem>>, vector<8x32xf32>,
    %c1_i32 = arith.constant 1 : i32
    %141 = arith.cmpi eq, %arg1, %c1_i32 : i32
    %142 = arith.extui %141 : i1 to i32
    %c0_i32_70 = arith.constant 0 : i32
    %143 = arith.cmpi ne, %142, %c0_i32_70 : i32
    scf.if %143 {
      %144 = vector.extract_strided_slice %139 {offsets = [0, 0], sizes = [1, 32], strides = [1, 1]} : vector<8x32xf32> to vector<1x32xf32>
      %c0_71 = arith.constant 0 : index
      %c0_72 = arith.constant 0 : index
      %145 = vector.load %arg18[%c0_71, %c0_72] : memref<32x1xf32, #tpu.memory_space<vmem>>, vector<32x1xf32>
      %cst_73 = arith.constant dense<0.000000e+00> : vector<1x1xf32>
      %146 = tpu.matmul %144, %145, %cst_73 {dimension_numbers = #tpu.dot_dimension_numbers<[1], [0], [0], [1], [0, 0, 1, 1], [], []>} : vector<1x32xf32>, vector<32x1xf32>, vector<1x1xf32> -> vector<1x1xf32>
      %c0_74 = arith.constant 0 : index
      %c0_75 = arith.constant 0 : index
      %147 = vector.load %arg19[%c0_74, %c0_75] : memref<1x1xf32, #tpu.memory_space<vmem>>, vector<1x1xf32>
      %148 = arith.addf %146, %147 : vector<1x1xf32>
      %149 = arith.negf %148 : vector<1x1xf32>
      %150 = math.exp %149 : vector<1x1xf32>
      %cst_76 = arith.constant 1.000000e+00 : f32
      %151 = vector.broadcast %cst_76 : f32 to vector<1x1xf32>
      %152 = arith.addf %151, %150 : vector<1x1xf32>
      %153 = arith.divf %151, %152 : vector<1x1xf32>
      %c0_77 = arith.constant 0 : index
      %c0_78 = arith.constant 0 : index
      %c0_79 = arith.constant 0 : index
      %154 = vector.load %arg20[%c0_77, %c0_78, %c0_79] : memref<1x1x1xf32, #tpu.memory_space<vmem>>, vector<1x1x1xf32>
      %155 = vector.shape_cast %154 : vector<1x1x1xf32> to vector<1x1xf32>
      %156 = vector.shape_cast %153 : vector<1x1xf32> to vector<1x1x1xf32>
      tpu.vector_store %arg20[%c0_77, %c0_78, %c0_79], %156 {strides = array<i32>} : memref<1x1x1xf32, #tpu.memory_space<vmem>>, vector<1x1x1xf32>,
    } else {
    }
    return
  }
  func.func @transform_0(%arg0: i32, %arg1: i32) -> (i32, i32, i32) {
    %c0_i32 = arith.constant 0 : i32
    %c0_i32_0 = arith.constant 0 : i32
    %c0_i32_1 = arith.constant 0 : i32
    return %arg0, %c0_i32, %c0_i32_0 : i32, i32, i32
  }
  func.func @transform_1(%arg0: i32, %arg1: i32) -> (i32, i32, i32) {
    %c0_i32 = arith.constant 0 : i32
    %c0_i32_0 = arith.constant 0 : i32
    %c0_i32_1 = arith.constant 0 : i32
    return %arg0, %c0_i32, %c0_i32_0 : i32, i32, i32
  }
  func.func @transform_2(%arg0: i32, %arg1: i32) -> (i32, i32) {
    %c0_i32 = arith.constant 0 : i32
    %c0_i32_0 = arith.constant 0 : i32
    %c0_i32_1 = arith.constant 0 : i32
    return %c0_i32, %c0_i32_0 : i32, i32
  }
  func.func @transform_3(%arg0: i32, %arg1: i32) -> (i32, i32) {
    %c0_i32 = arith.constant 0 : i32
    %c0_i32_0 = arith.constant 0 : i32
    %c0_i32_1 = arith.constant 0 : i32
    return %c0_i32, %c0_i32_0 : i32, i32
  }
  func.func @transform_4(%arg0: i32, %arg1: i32) -> (i32, i32, i32) {
    %c0_i32 = arith.constant 0 : i32
    %c0_i32_0 = arith.constant 0 : i32
    %c0_i32_1 = arith.constant 0 : i32
    return %arg1, %c0_i32, %c0_i32_0 : i32, i32, i32
  }
  func.func @transform_5(%arg0: i32, %arg1: i32) -> (i32, i32, i32) {
    %c0_i32 = arith.constant 0 : i32
    %c0_i32_0 = arith.constant 0 : i32
    %c0_i32_1 = arith.constant 0 : i32
    return %arg1, %c0_i32, %c0_i32_0 : i32, i32, i32
  }
  func.func @transform_6(%arg0: i32, %arg1: i32) -> (i32, i32, i32) {
    %c0_i32 = arith.constant 0 : i32
    %c0_i32_0 = arith.constant 0 : i32
    %c0_i32_1 = arith.constant 0 : i32
    return %arg1, %c0_i32, %c0_i32_0 : i32, i32, i32
  }
  func.func @transform_7(%arg0: i32, %arg1: i32) -> (i32, i32, i32) {
    %c0_i32 = arith.constant 0 : i32
    %c0_i32_0 = arith.constant 0 : i32
    %c0_i32_1 = arith.constant 0 : i32
    return %arg1, %c0_i32, %c0_i32_0 : i32, i32, i32
  }
  func.func @transform_8(%arg0: i32, %arg1: i32) -> (i32, i32, i32) {
    %c0_i32 = arith.constant 0 : i32
    %c0_i32_0 = arith.constant 0 : i32
    %c0_i32_1 = arith.constant 0 : i32
    return %arg1, %c0_i32, %c0_i32_0 : i32, i32, i32
  }
  func.func @transform_9(%arg0: i32, %arg1: i32) -> (i32, i32, i32) {
    %c0_i32 = arith.constant 0 : i32
    %c0_i32_0 = arith.constant 0 : i32
    %c0_i32_1 = arith.constant 0 : i32
    return %arg1, %c0_i32, %c0_i32_0 : i32, i32, i32
  }
  func.func @transform_10(%arg0: i32, %arg1: i32) -> (i32, i32, i32) {
    %c0_i32 = arith.constant 0 : i32
    %c0_i32_0 = arith.constant 0 : i32
    %c0_i32_1 = arith.constant 0 : i32
    return %arg1, %c0_i32, %c0_i32_0 : i32, i32, i32
  }
  func.func @transform_11(%arg0: i32, %arg1: i32) -> (i32, i32, i32) {
    %c0_i32 = arith.constant 0 : i32
    %c0_i32_0 = arith.constant 0 : i32
    %c0_i32_1 = arith.constant 0 : i32
    return %arg1, %c0_i32, %c0_i32_0 : i32, i32, i32
  }
  func.func @transform_12(%arg0: i32, %arg1: i32) -> (i32, i32, i32) {
    %c0_i32 = arith.constant 0 : i32
    %c0_i32_0 = arith.constant 0 : i32
    %c0_i32_1 = arith.constant 0 : i32
    return %arg1, %c0_i32, %c0_i32_0 : i32, i32, i32
  }
  func.func @transform_13(%arg0: i32, %arg1: i32) -> (i32, i32, i32) {
    %c0_i32 = arith.constant 0 : i32
    %c0_i32_0 = arith.constant 0 : i32
    %c0_i32_1 = arith.constant 0 : i32
    return %arg1, %c0_i32, %c0_i32_0 : i32, i32, i32
  }
  func.func @transform_14(%arg0: i32, %arg1: i32) -> (i32, i32, i32) {
    %c0_i32 = arith.constant 0 : i32
    %c0_i32_0 = arith.constant 0 : i32
    %c0_i32_1 = arith.constant 0 : i32
    return %arg1, %c0_i32, %c0_i32_0 : i32, i32, i32
  }
  func.func @transform_15(%arg0: i32, %arg1: i32) -> (i32, i32, i32) {
    %c0_i32 = arith.constant 0 : i32
    %c0_i32_0 = arith.constant 0 : i32
    %c0_i32_1 = arith.constant 0 : i32
    return %arg1, %c0_i32, %c0_i32_0 : i32, i32, i32
  }
  func.func @transform_16(%arg0: i32, %arg1: i32) -> (i32, i32) {
    %c0_i32 = arith.constant 0 : i32
    %c0_i32_0 = arith.constant 0 : i32
    %c0_i32_1 = arith.constant 0 : i32
    return %c0_i32, %c0_i32_0 : i32, i32
  }
  func.func @transform_17(%arg0: i32, %arg1: i32) -> (i32, i32) {
    %c0_i32 = arith.constant 0 : i32
    %c0_i32_0 = arith.constant 0 : i32
    %c0_i32_1 = arith.constant 0 : i32
    return %c0_i32, %c0_i32_0 : i32, i32
  }
  func.func @transform_18(%arg0: i32, %arg1: i32) -> (i32, i32, i32) {
    %c0_i32 = arith.constant 0 : i32
    %c0_i32_0 = arith.constant 0 : i32
    %c0_i32_1 = arith.constant 0 : i32
    return %arg0, %c0_i32, %c0_i32_0 : i32, i32, i32
  }
}

</mosaic_0001>

<llo_original>
// kernel: bert_text_match_forward.1
$region0: #{bert_text_match_forward.1}
  #allocation0 [shape = 'u32[]', space=smem, size = 0x4, offset = 0x4, fixed_abs, tag = 'smem constant byte address 0x4 - core index']
  #allocation1 [shape = 'u32[144,128]{1,0:T(1,128)}', space=vmem, size = 0x12000, scoped, tag = 'internal scratch']
  #allocation2 [shape = 'f32[8,32]{1,0:T(8,128)}', space=vmem, size = 0x1000, scoped, tag = 'scratch operand']
  #allocation3 [shape = 'f32[1,1]{1,0:T(1,128)S(1)}', space=vmem, size = 0x200, scoped, tag = 'scoped memory for bert_text_match_forward.1']
  %s0 = inlined_call_operand.vmem [shape: f32[2,8,32], index: 0, kind: input, shape index: {}]
  %s1 = inlined_call_operand.vmem [shape: f32[2,1,8], index: 1, kind: input, shape index: {}]
  %s2 = inlined_call_operand.vmem [shape: f32[1,32], index: 2, kind: input, shape index: {}]
  %s3 = inlined_call_operand.vmem [shape: f32[1,32], index: 3, kind: input, shape index: {}]
  %s4 = inlined_call_operand.vmem [shape: f32[2,32,96], index: 4, kind: input, shape index: {}]
  %s5 = inlined_call_operand.vmem [shape: f32[2,1,96], index: 5, kind: input, shape index: {}]
  %s6 = inlined_call_operand.vmem [shape: f32[2,32,32], index: 6, kind: input, shape index: {}]
  %s7 = inlined_call_operand.vmem [shape: f32[2,1,32], index: 7, kind: input, shape index: {}]
  %s8 = inlined_call_operand.vmem [shape: f32[2,1,32], index: 8, kind: input, shape index: {}]
  %s9 = inlined_call_operand.vmem [shape: f32[2,1,32], index: 9, kind: input, shape index: {}]
  %s10 = inlined_call_operand.vmem [shape: f32[2,32,64], index: 10, kind: input, shape index: {}]
  %s11 = inlined_call_operand.vmem [shape: f32[2,1,64], index: 11, kind: input, shape index: {}]
  %s12 = inlined_call_operand.vmem [shape: f32[2,64,32], index: 12, kind: input, shape index: {}]
  %s13 = inlined_call_operand.vmem [shape: f32[2,1,32], index: 13, kind: input, shape index: {}]
  %s14 = inlined_call_operand.vmem [shape: f32[2,1,32], index: 14, kind: input, shape index: {}]
  %s15 = inlined_call_operand.vmem [shape: f32[2,1,32], index: 15, kind: input, shape index: {}]
  %s16 = inlined_call_operand.vmem [shape: f32[32,1], index: 16, kind: input, shape index: {}]
  %s17 = inlined_call_operand.<no memory space> [shape: f32[1,1], index: 17, kind: input, shape index: {}]
  %s18 = inlined_call_operand.vmem [shape: f32[2,1,1], index: 18, kind: output, shape index: {}]
  %s19 = sld [smem:[#allocation0]]
  $region113: #{bert_text_match_forward.1} parent=0
    _
  %s21 = ssub.s32 1, %s19
  %s22 = scalar_select 0, %s21, %s19
  %v23 = vstv %s17
  %24 = vst [vmem:[#allocation3] sm:$0x1] %v23
  loop: start=0, step=1, limit=6
  $region2: #{bert_text_match_forward.1} parent=0 // loop_pre_header
    _
  $region3: #{bert_text_match_forward.1} parent=0 // loop_header
    %s26 = sphi 0, %s30
    %p27 = scmp.ge.s32.totalorder %s26, 6
    %s33 = sphi 0, %s45
    %s34 = sphi 0, %s41
    %s35 = sphi 0, %s33
    %s36 = sphi 0, %s34
    %s37 = sphi 0, %s35
    %s38 = sphi 0, %s36
    %s48 = sphi 0, %s50
    %s51 = sphi 0, %s48
    %s52 = sphi 0, %s51
    %s68 = sphi 0, %s52
    %s74 = sphi 0, %s76
    %s77 = sphi 0, %s74
    %s78 = sphi 0, %s77
    %s94 = sphi 0, %s78
    %s98 = sphi 0, %s98
    %s100 = sphi 0, %s98
    %s101 = sphi 0, %s100
    %s115 = sphi 0, %s101
    %s119 = sphi 0, %s119
    %s121 = sphi 0, %s119
    %s122 = sphi 0, %s121
    %s136 = sphi 0, %s122
    %s142 = sphi 0, %s144
    %s145 = sphi 0, %s142
    %s146 = sphi 0, %s145
    %s162 = sphi 0, %s146
    %s168 = sphi 0, %s170
    %s171 = sphi 0, %s168
    %s172 = sphi 0, %s171
    %s188 = sphi 0, %s172
    %s194 = sphi 0, %s196
    %s197 = sphi 0, %s194
    %s198 = sphi 0, %s197
    %s214 = sphi 0, %s198
    %s220 = sphi 0, %s222
    %s223 = sphi 0, %s220
    %s224 = sphi 0, %s223
    %s240 = sphi 0, %s224
    %s246 = sphi 0, %s248
    %s249 = sphi 0, %s246
    %s250 = sphi 0, %s249
    %s266 = sphi 0, %s250
    %s272 = sphi 0, %s274
    %s275 = sphi 0, %s272
    %s276 = sphi 0, %s275
    %s292 = sphi 0, %s276
    %s298 = sphi 0, %s300
    %s301 = sphi 0, %s298
    %s302 = sphi 0, %s301
    %s318 = sphi 0, %s302
    %s324 = sphi 0, %s326
    %s327 = sphi 0, %s324
    %s328 = sphi 0, %s327
    %s344 = sphi 0, %s328
    %s350 = sphi 0, %s352
    %s353 = sphi 0, %s350
    %s354 = sphi 0, %s353
    %s370 = sphi 0, %s354
    %s376 = sphi 0, %s378
    %s379 = sphi 0, %s376
    %s380 = sphi 0, %s379
    %s396 = sphi 0, %s380
    %s402 = sphi 0, %s404
    %s405 = sphi 0, %s402
    %s406 = sphi 0, %s405
    %s422 = sphi 0, %s406
    %s428 = sphi 0, %s430
    %s431 = sphi 0, %s428
    %s432 = sphi 0, %s431
    %s448 = sphi 0, %s432
    %s452 = sphi 0, %s452
    %s454 = sphi 0, %s452
    %s455 = sphi 0, %s454
    %s469 = sphi 0, %s455
    %s473 = sphi 0, %s473
    %s475 = sphi 0, %s473
    %s476 = sphi 0, %s475
    %s490 = sphi 0, %s476
    %s496 = sphi 0, %s498
    %s499 = sphi 0, %s496
    %s500 = sphi 0, %s499
    %s516 = sphi 0, %s500
  $region4: #{bert_text_match_forward.1} parent=0 // loop_header_branch
    %29 = sbr.rel (%p27) target = $region8
  $region5: #{bert_text_match_forward.1} parent=0 // loop_body
    %s31 = ssub.s32 %s26, 1
    %s32 = ssub.s32 %s26, 2
    %s39 = sadd.s32 1, %s34
    %p40 = scmp.ge.s32.totalorder %s39, 2
    %s41 = scalar_select %p40, 0, %s39
    %s42 = sadd.s32 1, %s33
    %s43 = scalar_select %p40, %s42, %s33
    %p44 = scmp.ge.s32.totalorder %s43, 2
    %s45 = scalar_select %p44, 0, %s43
    %s46 = ssub.s32 %s33, %s45
    %p47 = scmp.eq.s32.totalorder %s46, 0
    %s49 = sadd.s32 %s48, 1
    %s50 = scalar_select %p47, %s48, %s49
    %p53 = pneg %p47
    %p54 = scmp.eq.s32.totalorder %s26, 3
    %p55 = por %p53, %p54
    %p56 = scmp.ne.s32.totalorder %s48, %s51
    %p57 = scmp.eq.s32.totalorder %s26, 0
    %p58 = por %p56, %p57
    %p59 = scmp.ne.s32.totalorder %s48, %s51
    %p60 = scmp.eq.s32.totalorder %s31, 3
    %p61 = por %p59, %p60
    %p62 = scmp.ne.s32.totalorder %s51, %s52
    %p63 = scmp.eq.s32.totalorder %s31, 0
    %p64 = por %p62, %p63
    %p65 = scmp.ne.s32.totalorder %s51, %s52
    %p66 = scmp.eq.s32.totalorder %s32, 3
    %p67 = por %p65, %p66
    %p69 = scmp.ne.s32.totalorder %s52, %s68
    %p70 = scmp.eq.s32.totalorder %s32, 0
    %p71 = por %p69, %p70
    %s72 = ssub.s32 %s33, %s45
    %p73 = scmp.eq.s32.totalorder %s72, 0
    %s75 = sadd.s32 %s74, 1
    %s76 = scalar_select %p73, %s74, %s75
    %p79 = pneg %p73
    %p80 = scmp.eq.s32.totalorder %s26, 3
    %p81 = por %p79, %p80
    %p82 = scmp.ne.s32.totalorder %s74, %s77
    %p83 = scmp.eq.s32.totalorder %s26, 0
    %p84 = por %p82, %p83
    %p85 = scmp.ne.s32.totalorder %s74, %s77
    %p86 = scmp.eq.s32.totalorder %s31, 3
    %p87 = por %p85, %p86
    %p88 = scmp.ne.s32.totalorder %s77, %s78
    %p89 = scmp.eq.s32.totalorder %s31, 0
    %p90 = por %p88, %p89
    %p91 = scmp.ne.s32.totalorder %s77, %s78
    %p92 = scmp.eq.s32.totalorder %s32, 3
    %p93 = por %p91, %p92
    %p95 = scmp.ne.s32.totalorder %s78, %s94
    %p96 = scmp.eq.s32.totalorder %s32, 0
    %p97 = por %p95, %p96
    %s99 = sadd.s32 %s98, 1
    %p102 = scmp.eq.s32.totalorder %s26, 3
    %p103 = scmp.ne.s32.totalorder %s98, %s100
    %p104 = scmp.eq.s32.totalorder %s26, 0
    %p105 = por %p103, %p104
    %p106 = scmp.ne.s32.totalorder %s98, %s100
    %p107 = scmp.eq.s32.totalorder %s31, 3
    %p108 = por %p106, %p107
    %p109 = scmp.ne.s32.totalorder %s100, %s101
    %p110 = scmp.eq.s32.totalorder %s31, 0
    %p111 = por %p109, %p110
    %p112 = scmp.ne.s32.totalorder %s100, %s101
    %p113 = scmp.eq.s32.totalorder %s32, 3
    %p114 = por %p112, %p113
    %p116 = scmp.ne.s32.totalorder %s101, %s115
    %p117 = scmp.eq.s32.totalorder %s32, 0
    %p118 = por %p116, %p117
    %s120 = sadd.s32 %s119, 1
    %p123 = scmp.eq.s32.totalorder %s26, 3
    %p124 = scmp.ne.s32.totalorder %s119, %s121
    %p125 = scmp.eq.s32.totalorder %s26, 0
    %p126 = por %p124, %p125
    %p127 = scmp.ne.s32.totalorder %s119, %s121
    %p128 = scmp.eq.s32.totalorder %s31, 3
    %p129 = por %p127, %p128
    %p130 = scmp.ne.s32.totalorder %s121, %s122
    %p131 = scmp.eq.s32.totalorder %s31, 0
    %p132 = por %p130, %p131
    %p133 = scmp.ne.s32.totalorder %s121, %s122
    %p134 = scmp.eq.s32.totalorder %s32, 3
    %p135 = por %p133, %p134
    %p137 = scmp.ne.s32.totalorder %s122, %s136
    %p138 = scmp.eq.s32.totalorder %s32, 0
    %p139 = por %p137, %p138
    %s140 = ssub.s32 %s34, %s41
    %p141 = scmp.eq.s32.totalorder %s140, 0
    %s143 = sadd.s32 %s142, 1
    %s144 = scalar_select %p141, %s142, %s143
    %p147 = pneg %p141
    %p148 = scmp.eq.s32.totalorder %s26, 3
    %p149 = por %p147, %p148
    %p150 = scmp.ne.s32.totalorder %s142, %s145
    %p151 = scmp.eq.s32.totalorder %s26, 0
    %p152 = por %p150, %p151
    %p153 = scmp.ne.s32.totalorder %s142, %s145
    %p154 = scmp.eq.s32.totalorder %s31, 3
    %p155 = por %p153, %p154
    %p156 = scmp.ne.s32.totalorder %s145, %s146
    %p157 = scmp.eq.s32.totalorder %s31, 0
    %p158 = por %p156, %p157
    %p159 = scmp.ne.s32.totalorder %s145, %s146
    %p160 = scmp.eq.s32.totalorder %s32, 3
    %p161 = por %p159, %p160
    %p163 = scmp.ne.s32.totalorder %s146, %s162
    %p164 = scmp.eq.s32.totalorder %s32, 0
    %p165 = por %p163, %p164
    %s166 = ssub.s32 %s34, %s41
    %p167 = scmp.eq.s32.totalorder %s166, 0
    %s169 = sadd.s32 %s168, 1
    %s170 = scalar_select %p167, %s168, %s169
    %p173 = pneg %p167
    %p174 = scmp.eq.s32.totalorder %s26, 3
    %p175 = por %p173, %p174
    %p176 = scmp.ne.s32.totalorder %s168, %s171
    %p177 = scmp.eq.s32.totalorder %s26, 0
    %p178 = por %p176, %p177
    %p179 = scmp.ne.s32.totalorder %s168, %s171
    %p180 = scmp.eq.s32.totalorder %s31, 3
    %p181 = por %p179, %p180
    %p182 = scmp.ne.s32.totalorder %s171, %s172
    %p183 = scmp.eq.s32.totalorder %s31, 0
    %p184 = por %p182, %p183
    %p185 = scmp.ne.s32.totalorder %s171, %s172
    %p186 = scmp.eq.s32.totalorder %s32, 3
    %p187 = por %p185, %p186
    %p189 = scmp.ne.s32.totalorder %s172, %s188
    %p190 = scmp.eq.s32.totalorder %s32, 0
    %p191 = por %p189, %p190
    %s192 = ssub.s32 %s34, %s41
    %p193 = scmp.eq.s32.totalorder %s192, 0
    %s195 = sadd.s32 %s194, 1
    %s196 = scalar_select %p193, %s194, %s195
    %p199 = pneg %p193
    %p200 = scmp.eq.s32.totalorder %s26, 3
    %p201 = por %p199, %p200
    %p202 = scmp.ne.s32.totalorder %s194, %s197
    %p203 = scmp.eq.s32.totalorder %s26, 0
    %p204 = por %p202, %p203
    %p205 = scmp.ne.s32.totalorder %s194, %s197
    %p206 = scmp.eq.s32.totalorder %s31, 3
    %p207 = por %p205, %p206
    %p208 = scmp.ne.s32.totalorder %s197, %s198
    %p209 = scmp.eq.s32.totalorder %s31, 0
    %p210 = por %p208, %p209
    %p211 = scmp.ne.s32.totalorder %s197, %s198
    %p212 = scmp.eq.s32.totalorder %s32, 3
    %p213 = por %p211, %p212
    %p215 = scmp.ne.s32.totalorder %s198, %s214
    %p216 = scmp.eq.s32.totalorder %s32, 0
    %p217 = por %p215, %p216
    %s218 = ssub.s32 %s34, %s41
    %p219 = scmp.eq.s32.totalorder %s218, 0
    %s221 = sadd.s32 %s220, 1
    %s222 = scalar_select %p219, %s220, %s221
    %p225 = pneg %p219
    %p226 = scmp.eq.s32.totalorder %s26, 3
    %p227 = por %p225, %p226
    %p228 = scmp.ne.s32.totalorder %s220, %s223
    %p229 = scmp.eq.s32.totalorder %s26, 0
    %p230 = por %p228, %p229
    %p231 = scmp.ne.s32.totalorder %s220, %s223
    %p232 = scmp.eq.s32.totalorder %s31, 3
    %p233 = por %p231, %p232
    %p234 = scmp.ne.s32.totalorder %s223, %s224
    %p235 = scmp.eq.s32.totalorder %s31, 0
    %p236 = por %p234, %p235
    %p237 = scmp.ne.s32.totalorder %s223, %s224
    %p238 = scmp.eq.s32.totalorder %s32, 3
    %p239 = por %p237, %p238
    %p241 = scmp.ne.s32.totalorder %s224, %s240
    %p242 = scmp.eq.s32.totalorder %s32, 0
    %p243 = por %p241, %p242
    %s244 = ssub.s32 %s34, %s41
    %p245 = scmp.eq.s32.totalorder %s244, 0
    %s247 = sadd.s32 %s246, 1
    %s248 = scalar_select %p245, %s246, %s247
    %p251 = pneg %p245
    %p252 = scmp.eq.s32.totalorder %s26, 3
    %p253 = por %p251, %p252
    %p254 = scmp.ne.s32.totalorder %s246, %s249
    %p255 = scmp.eq.s32.totalorder %s26, 0
    %p256 = por %p254, %p255
    %p257 = scmp.ne.s32.totalorder %s246, %s249
    %p258 = scmp.eq.s32.totalorder %s31, 3
    %p259 = por %p257, %p258
    %p260 = scmp.ne.s32.totalorder %s249, %s250
    %p261 = scmp.eq.s32.totalorder %s31, 0
    %p262 = por %p260, %p261
    %p263 = scmp.ne.s32.totalorder %s249, %s250
    %p264 = scmp.eq.s32.totalorder %s32, 3
    %p265 = por %p263, %p264
    %p267 = scmp.ne.s32.totalorder %s250, %s266
    %p268 = scmp.eq.s32.totalorder %s32, 0
    %p269 = por %p267, %p268
    %s270 = ssub.s32 %s34, %s41
    %p271 = scmp.eq.s32.totalorder %s270, 0
    %s273 = sadd.s32 %s272, 1
    %s274 = scalar_select %p271, %s272, %s273
    %p277 = pneg %p271
    %p278 = scmp.eq.s32.totalorder %s26, 3
    %p279 = por %p277, %p278
    %p280 = scmp.ne.s32.totalorder %s272, %s275
    %p281 = scmp.eq.s32.totalorder %s26, 0
    %p282 = por %p280, %p281
    %p283 = scmp.ne.s32.totalorder %s272, %s275
    %p284 = scmp.eq.s32.totalorder %s31, 3
    %p285 = por %p283, %p284
    %p286 = scmp.ne.s32.totalorder %s275, %s276
    %p287 = scmp.eq.s32.totalorder %s31, 0
    %p288 = por %p286, %p287
    %p289 = scmp.ne.s32.totalorder %s275, %s276
    %p290 = scmp.eq.s32.totalorder %s32, 3
    %p291 = por %p289, %p290
    %p293 = scmp.ne.s32.totalorder %s276, %s292
    %p294 = scmp.eq.s32.totalorder %s32, 0
    %p295 = por %p293, %p294
    %s296 = ssub.s32 %s34, %s41
    %p297 = scmp.eq.s32.totalorder %s296, 0
    %s299 = sadd.s32 %s298, 1
    %s300 = scalar_select %p297, %s298, %s299
    %p303 = pneg %p297
    %p304 = scmp.eq.s32.totalorder %s26, 3
    %p305 = por %p303, %p304
    %p306 = scmp.ne.s32.totalorder %s298, %s301
    %p307 = scmp.eq.s32.totalorder %s26, 0
    %p308 = por %p306, %p307
    %p309 = scmp.ne.s32.totalorder %s298, %s301
    %p310 = scmp.eq.s32.totalorder %s31, 3
    %p311 = por %p309, %p310
    %p312 = scmp.ne.s32.totalorder %s301, %s302
    %p313 = scmp.eq.s32.totalorder %s31, 0
    %p314 = por %p312, %p313
    %p315 = scmp.ne.s32.totalorder %s301, %s302
    %p316 = scmp.eq.s32.totalorder %s32, 3
    %p317 = por %p315, %p316
    %p319 = scmp.ne.s32.totalorder %s302, %s318
    %p320 = scmp.eq.s32.totalorder %s32, 0
    %p321 = por %p319, %p320
    %s322 = ssub.s32 %s34, %s41
    %p323 = scmp.eq.s32.totalorder %s322, 0
    %s325 = sadd.s32 %s324, 1
    %s326 = scalar_select %p323, %s324, %s325
    %p329 = pneg %p323
    %p330 = scmp.eq.s32.totalorder %s26, 3
    %p331 = por %p329, %p330
    %p332 = scmp.ne.s32.totalorder %s324, %s327
    %p333 = scmp.eq.s32.totalorder %s26, 0
    %p334 = por %p332, %p333
    %p335 = scmp.ne.s32.totalorder %s324, %s327
    %p336 = scmp.eq.s32.totalorder %s31, 3
    %p337 = por %p335, %p336
    %p338 = scmp.ne.s32.totalorder %s327, %s328
    %p339 = scmp.eq.s32.totalorder %s31, 0
    %p340 = por %p338, %p339
    %p341 = scmp.ne.s32.totalorder %s327, %s328
    %p342 = scmp.eq.s32.totalorder %s32, 3
    %p343 = por %p341, %p342
    %p345 = scmp.ne.s32.totalorder %s328, %s344
    %p346 = scmp.eq.s32.totalorder %s32, 0
    %p347 = por %p345, %p346
    %s348 = ssub.s32 %s34, %s41
    %p349 = scmp.eq.s32.totalorder %s348, 0
    %s351 = sadd.s32 %s350, 1
    %s352 = scalar_select %p349, %s350, %s351
    %p355 = pneg %p349
    %p356 = scmp.eq.s32.totalorder %s26, 3
    %p357 = por %p355, %p356
    %p358 = scmp.ne.s32.totalorder %s350, %s353
    %p359 = scmp.eq.s32.totalorder %s26, 0
    %p360 = por %p358, %p359
    %p361 = scmp.ne.s32.totalorder %s350, %s353
    %p362 = scmp.eq.s32.totalorder %s31, 3
    %p363 = por %p361, %p362
    %p364 = scmp.ne.s32.totalorder %s353, %s354
    %p365 = scmp.eq.s32.totalorder %s31, 0
    %p366 = por %p364, %p365
    %p367 = scmp.ne.s32.totalorder %s353, %s354
    %p368 = scmp.eq.s32.totalorder %s32, 3
    %p369 = por %p367, %p368
    %p371 = scmp.ne.s32.totalorder %s354, %s370
    %p372 = scmp.eq.s32.totalorder %s32, 0
    %p373 = por %p371, %p372
    %s374 = ssub.s32 %s34, %s41
    %p375 = scmp.eq.s32.totalorder %s374, 0
    %s377 = sadd.s32 %s376, 1
    %s378 = scalar_select %p375, %s376, %s377
    %p381 = pneg %p375
    %p382 = scmp.eq.s32.totalorder %s26, 3
    %p383 = por %p381, %p382
    %p384 = scmp.ne.s32.totalorder %s376, %s379
    %p385 = scmp.eq.s32.totalorder %s26, 0
    %p386 = por %p384, %p385
    %p387 = scmp.ne.s32.totalorder %s376, %s379
    %p388 = scmp.eq.s32.totalorder %s31, 3
    %p389 = por %p387, %p388
    %p390 = scmp.ne.s32.totalorder %s379, %s380
    %p391 = scmp.eq.s32.totalorder %s31, 0
    %p392 = por %p390, %p391
    %p393 = scmp.ne.s32.totalorder %s379, %s380
    %p394 = scmp.eq.s32.totalorder %s32, 3
    %p395 = por %p393, %p394
    %p397 = scmp.ne.s32.totalorder %s380, %s396
    %p398 = scmp.eq.s32.totalorder %s32, 0
    %p399 = por %p397, %p398
    %s400 = ssub.s32 %s34, %s41
    %p401 = scmp.eq.s32.totalorder %s400, 0
    %s403 = sadd.s32 %s402, 1
    %s404 = scalar_select %p401, %s402, %s403
    %p407 = pneg %p401
    %p408 = scmp.eq.s32.totalorder %s26, 3
    %p409 = por %p407, %p408
    %p410 = scmp.ne.s32.totalorder %s402, %s405
    %p411 = scmp.eq.s32.totalorder %s26, 0
    %p412 = por %p410, %p411
    %p413 = scmp.ne.s32.totalorder %s402, %s405
    %p414 = scmp.eq.s32.totalorder %s31, 3
    %p415 = por %p413, %p414
    %p416 = scmp.ne.s32.totalorder %s405, %s406
    %p417 = scmp.eq.s32.totalorder %s31, 0
    %p418 = por %p416, %p417
    %p419 = scmp.ne.s32.totalorder %s405, %s406
    %p420 = scmp.eq.s32.totalorder %s32, 3
    %p421 = por %p419, %p420
    %p423 = scmp.ne.s32.totalorder %s406, %s422
    %p424 = scmp.eq.s32.totalorder %s32, 0
    %p425 = por %p423, %p424
    %s426 = ssub.s32 %s34, %s41
    %p427 = scmp.eq.s32.totalorder %s426, 0
    %s429 = sadd.s32 %s428, 1
    %s430 = scalar_select %p427, %s428, %s429
    %p433 = pneg %p427
    %p434 = scmp.eq.s32.totalorder %s26, 3
    %p435 = por %p433, %p434
    %p436 = scmp.ne.s32.totalorder %s428, %s431
    %p437 = scmp.eq.s32.totalorder %s26, 0
    %p438 = por %p436, %p437
    %p439 = scmp.ne.s32.totalorder %s428, %s431
    %p440 = scmp.eq.s32.totalorder %s31, 3
    %p441 = por %p439, %p440
    %p442 = scmp.ne.s32.totalorder %s431, %s432
    %p443 = scmp.eq.s32.totalorder %s31, 0
    %p444 = por %p442, %p443
    %p445 = scmp.ne.s32.totalorder %s431, %s432
    %p446 = scmp.eq.s32.totalorder %s32, 3
    %p447 = por %p445, %p446
    %p449 = scmp.ne.s32.totalorder %s432, %s448
    %p450 = scmp.eq.s32.totalorder %s32, 0
    %p451 = por %p449, %p450
    %s453 = sadd.s32 %s452, 1
    %p456 = scmp.eq.s32.totalorder %s26, 3
    %p457 = scmp.ne.s32.totalorder %s452, %s454
    %p458 = scmp.eq.s32.totalorder %s26, 0
    %p459 = por %p457, %p458
    %p460 = scmp.ne.s32.totalorder %s452, %s454
    %p461 = scmp.eq.s32.totalorder %s31, 3
    %p462 = por %p460, %p461
    %p463 = scmp.ne.s32.totalorder %s454, %s455
    %p464 = scmp.eq.s32.totalorder %s31, 0
    %p465 = por %p463, %p464
    %p466 = scmp.ne.s32.totalorder %s454, %s455
    %p467 = scmp.eq.s32.totalorder %s32, 3
    %p468 = por %p466, %p467
    %p470 = scmp.ne.s32.totalorder %s455, %s469
    %p471 = scmp.eq.s32.totalorder %s32, 0
    %p472 = por %p470, %p471
    %s474 = sadd.s32 %s473, 1
    %p477 = scmp.eq.s32.totalorder %s26, 3
    %p478 = scmp.ne.s32.totalorder %s473, %s475
    %p479 = scmp.eq.s32.totalorder %s26, 0
    %p480 = por %p478, %p479
    %p481 = scmp.ne.s32.totalorder %s473, %s475
    %p482 = scmp.eq.s32.totalorder %s31, 3
    %p483 = por %p481, %p482
    %p484 = scmp.ne.s32.totalorder %s475, %s476
    %p485 = scmp.eq.s32.totalorder %s31, 0
    %p486 = por %p484, %p485
    %p487 = scmp.ne.s32.totalorder %s475, %s476
    %p488 = scmp.eq.s32.totalorder %s32, 3
    %p489 = por %p487, %p488
    %p491 = scmp.ne.s32.totalorder %s476, %s490
    %p492 = scmp.eq.s32.totalorder %s32, 0
    %p493 = por %p491, %p492
    %s494 = ssub.s32 %s33, %s45
    %p495 = scmp.eq.s32.totalorder %s494, 0
    %s497 = sadd.s32 %s496, 1
    %s498 = scalar_select %p495, %s496, %s497
    %p501 = pneg %p495
    %p502 = scmp.eq.s32.totalorder %s26, 3
    %p503 = por %p501, %p502
    %p504 = scmp.ne.s32.totalorder %s496, %s499
    %p505 = scmp.eq.s32.totalorder %s26, 0
    %p506 = por %p504, %p505
    %p507 = scmp.ne.s32.totalorder %s496, %s499
    %p508 = scmp.eq.s32.totalorder %s31, 3
    %p509 = por %p507, %p508
    %p510 = scmp.ne.s32.totalorder %s499, %s500
    %p511 = scmp.eq.s32.totalorder %s31, 0
    %p512 = por %p510, %p511
    %p513 = scmp.ne.s32.totalorder %s499, %s500
    %p514 = scmp.eq.s32.totalorder %s32, 3
    %p515 = por %p513, %p514
    %p517 = scmp.ne.s32.totalorder %s500, %s516
    %p518 = scmp.eq.s32.totalorder %s32, 0
    %p519 = por %p517, %p518
    %p520 = scmp.le.s32.totalorder 1, %s26
    %p521 = scmp.lt.s32.totalorder %s26, 5
    %p522 = pnand %p520, %p521
    %p523 = pneg %p522
    // Predicated region
    $region9: #{bert_text_match_forward.1} parent=5 // pred_check
      _
    $region10: #{bert_text_match_forward.1} parent=5 // pred_check_branch
      %525 = sbr.rel (%p522) target = $region12
    $region11: #{bert_text_match_forward.1} parent=5 // pred_region
      %s526 = ssub.s32 %s26, 1
      // Predicated region
      $region13: #{bert_text_match_forward.1} parent=11 // pred_check
        %p527 = pneg %p111
      $region14: #{bert_text_match_forward.1} parent=11 // pred_check_branch
        %529 = sbr.rel (%p527) target = $region16
      $region15: #{bert_text_match_forward.1} parent=11 // pred_region
        _
      $region16: #{bert_text_match_forward.1} parent=11 // pred_fallthru
        _
      // Predicated region
      $region17: #{bert_text_match_forward.1} parent=11 // pred_check
        %p530 = pneg %p132
      $region18: #{bert_text_match_forward.1} parent=11 // pred_check_branch
        %532 = sbr.rel (%p530) target = $region20
      $region19: #{bert_text_match_forward.1} parent=11 // pred_region
        _
      $region20: #{bert_text_match_forward.1} parent=11 // pred_fallthru
        _
      // Predicated region
      $region21: #{bert_text_match_forward.1} parent=11 // pred_check
        %p533 = pneg %p465
      $region22: #{bert_text_match_forward.1} parent=11 // pred_check_branch
        %535 = sbr.rel (%p533) target = $region24
      $region23: #{bert_text_match_forward.1} parent=11 // pred_region
        _
      $region24: #{bert_text_match_forward.1} parent=11 // pred_fallthru
        _
      // Predicated region
      $region25: #{bert_text_match_forward.1} parent=11 // pred_check
        %p536 = pneg %p486
      $region26: #{bert_text_match_forward.1} parent=11 // pred_check_branch
        %538 = sbr.rel (%p536) target = $region28
      $region27: #{bert_text_match_forward.1} parent=11 // pred_region
        _
      $region28: #{bert_text_match_forward.1} parent=11 // pred_fallthru
        _
    $region12: #{bert_text_match_forward.1} parent=5 // pred_fallthru
      _
    %p539 = scmp.lt.s32.totalorder %s26, 4
    // Predicated region
    $region29: #{bert_text_match_forward.1} parent=5 // pred_check
      %p540 = pneg %p539
    $region30: #{bert_text_match_forward.1} parent=5 // pred_check_branch
      %542 = sbr.rel (%p540) target = $region32
    $region31: #{bert_text_match_forward.1} parent=5 // pred_region
      // Predicated region
      $region33: #{bert_text_match_forward.1} parent=31 // pred_check
        %p543 = pneg %p58
      $region34: #{bert_text_match_forward.1} parent=31 // pred_check_branch
        %545 = sbr.rel (%p543) target = $region36
      $region35: #{bert_text_match_forward.1} parent=31 // pred_region
        %p546 = scmp.lt.s32.totalorder %s33, 1
        %s547 = scalar_select %p546, %s33, 1
        %s548 = smul.addr %s547, 8
        %s549 = scalar_lea.vmem %s0, %s548
      $region36: #{bert_text_match_forward.1} parent=31 // pred_fallthru
        _
      // Predicated region
      $region37: #{bert_text_match_forward.1} parent=31 // pred_check
        %p550 = pneg %p84
      $region38: #{bert_text_match_forward.1} parent=31 // pred_check_branch
        %552 = sbr.rel (%p550) target = $region40
      $region39: #{bert_text_match_forward.1} parent=31 // pred_region
        %p553 = scmp.lt.s32.totalorder %s33, 1
        %s554 = scalar_select %p553, %s33, 1
        %s555 = scalar_lea.vmem %s1, %s554
      $region40: #{bert_text_match_forward.1} parent=31 // pred_fallthru
        _
      // Predicated region
      $region41: #{bert_text_match_forward.1} parent=31 // pred_check
        %p556 = pneg %p152
      $region42: #{bert_text_match_forward.1} parent=31 // pred_check_branch
        %558 = sbr.rel (%p556) target = $region44
      $region43: #{bert_text_match_forward.1} parent=31 // pred_region
        %p559 = scmp.lt.s32.totalorder %s34, 1
        %s560 = scalar_select %p559, %s34, 1
        %s561 = smul.addr %s560, 4
        %s562 = smul.addr %s561, 8
        %s563 = scalar_lea.vmem %s4, %s562
      $region44: #{bert_text_match_forward.1} parent=31 // pred_fallthru
        _
      // Predicated region
      $region45: #{bert_text_match_forward.1} parent=31 // pred_check
        %p564 = pneg %p178
      $region46: #{bert_text_match_forward.1} parent=31 // pred_check_branch
        %566 = sbr.rel (%p564) target = $region48
      $region47: #{bert_text_match_forward.1} parent=31 // pred_region
        %p567 = scmp.lt.s32.totalorder %s34, 1
        %s568 = scalar_select %p567, %s34, 1
        %s569 = scalar_lea.vmem %s5, %s568
      $region48: #{bert_text_match_forward.1} parent=31 // pred_fallthru
        _
      // Predicated region
      $region49: #{bert_text_match_forward.1} parent=31 // pred_check
        %p570 = pneg %p204
      $region50: #{bert_text_match_forward.1} parent=31 // pred_check_branch
        %572 = sbr.rel (%p570) target = $region52
      $region51: #{bert_text_match_forward.1} parent=31 // pred_region
        %p573 = scmp.lt.s32.totalorder %s34, 1
        %s574 = scalar_select %p573, %s34, 1
        %s575 = smul.addr %s574, 4
        %s576 = smul.addr %s575, 8
        %s577 = scalar_lea.vmem %s6, %s576
      $region52: #{bert_text_match_forward.1} parent=31 // pred_fallthru
        _
      // Predicated region
      $region53: #{bert_text_match_forward.1} parent=31 // pred_check
        %p578 = pneg %p230
      $region54: #{bert_text_match_forward.1} parent=31 // pred_check_branch
        %580 = sbr.rel (%p578) target = $region56
      $region55: #{bert_text_match_forward.1} parent=31 // pred_region
        %p581 = scmp.lt.s32.totalorder %s34, 1
        %s582 = scalar_select %p581, %s34, 1
        %s583 = scalar_lea.vmem %s7, %s582
      $region56: #{bert_text_match_forward.1} parent=31 // pred_fallthru
        _
      // Predicated region
      $region57: #{bert_text_match_forward.1} parent=31 // pred_check
        %p584 = pneg %p256
      $region58: #{bert_text_match_forward.1} parent=31 // pred_check_branch
        %586 = sbr.rel (%p584) target = $region60
      $region59: #{bert_text_match_forward.1} parent=31 // pred_region
        %p587 = scmp.lt.s32.totalorder %s34, 1
        %s588 = scalar_select %p587, %s34, 1
        %s589 = scalar_lea.vmem %s8, %s588
      $region60: #{bert_text_match_forward.1} parent=31 // pred_fallthru
        _
      // Predicated region
      $region61: #{bert_text_match_forward.1} parent=31 // pred_check
        %p590 = pneg %p282
      $region62: #{bert_text_match_forward.1} parent=31 // pred_check_branch
        %592 = sbr.rel (%p590) target = $region64
      $region63: #{bert_text_match_forward.1} parent=31 // pred_region
        %p593 = scmp.lt.s32.totalorder %s34, 1
        %s594 = scalar_select %p593, %s34, 1
        %s595 = scalar_lea.vmem %s9, %s594
      $region64: #{bert_text_match_forward.1} parent=31 // pred_fallthru
        _
      // Predicated region
      $region65: #{bert_text_match_forward.1} parent=31 // pred_check
        %p596 = pneg %p308
      $region66: #{bert_text_match_forward.1} parent=31 // pred_check_branch
        %598 = sbr.rel (%p596) target = $region68
      $region67: #{bert_text_match_forward.1} parent=31 // pred_region
        %p599 = scmp.lt.s32.totalorder %s34, 1
        %s600 = scalar_select %p599, %s34, 1
        %s601 = smul.addr %s600, 4
        %s602 = smul.addr %s601, 8
        %s603 = scalar_lea.vmem %s10, %s602
      $region68: #{bert_text_match_forward.1} parent=31 // pred_fallthru
        _
      // Predicated region
      $region69: #{bert_text_match_forward.1} parent=31 // pred_check
        %p604 = pneg %p334
      $region70: #{bert_text_match_forward.1} parent=31 // pred_check_branch
        %606 = sbr.rel (%p604) target = $region72
      $region71: #{bert_text_match_forward.1} parent=31 // pred_region
        %p607 = scmp.lt.s32.totalorder %s34, 1
        %s608 = scalar_select %p607, %s34, 1
        %s609 = scalar_lea.vmem %s11, %s608
      $region72: #{bert_text_match_forward.1} parent=31 // pred_fallthru
        _
      // Predicated region
      $region73: #{bert_text_match_forward.1} parent=31 // pred_check
        %p610 = pneg %p360
      $region74: #{bert_text_match_forward.1} parent=31 // pred_check_branch
        %612 = sbr.rel (%p610) target = $region76
      $region75: #{bert_text_match_forward.1} parent=31 // pred_region
        %p613 = scmp.lt.s32.totalorder %s34, 1
        %s614 = scalar_select %p613, %s34, 1
        %s615 = smul.addr %s614, 8
        %s616 = smul.addr %s615, 8
        %s617 = scalar_lea.vmem %s12, %s616
      $region76: #{bert_text_match_forward.1} parent=31 // pred_fallthru
        _
      // Predicated region
      $region77: #{bert_text_match_forward.1} parent=31 // pred_check
        %p618 = pneg %p386
      $region78: #{bert_text_match_forward.1} parent=31 // pred_check_branch
        %620 = sbr.rel (%p618) target = $region80
      $region79: #{bert_text_match_forward.1} parent=31 // pred_region
        %p621 = scmp.lt.s32.totalorder %s34, 1
        %s622 = scalar_select %p621, %s34, 1
        %s623 = scalar_lea.vmem %s13, %s622
      $region80: #{bert_text_match_forward.1} parent=31 // pred_fallthru
        _
      // Predicated region
      $region81: #{bert_text_match_forward.1} parent=31 // pred_check
        %p624 = pneg %p412
      $region82: #{bert_text_match_forward.1} parent=31 // pred_check_branch
        %626 = sbr.rel (%p624) target = $region84
      $region83: #{bert_text_match_forward.1} parent=31 // pred_region
        %p627 = scmp.lt.s32.totalorder %s34, 1
        %s628 = scalar_select %p627, %s34, 1
        %s629 = scalar_lea.vmem %s14, %s628
      $region84: #{bert_text_match_forward.1} parent=31 // pred_fallthru
        _
      // Predicated region
      $region85: #{bert_text_match_forward.1} parent=31 // pred_check
        %p630 = pneg %p438
      $region86: #{bert_text_match_forward.1} parent=31 // pred_check_branch
        %632 = sbr.rel (%p630) target = $region88
      $region87: #{bert_text_match_forward.1} parent=31 // pred_region
        %p633 = scmp.lt.s32.totalorder %s34, 1
        %s634 = scalar_select %p633, %s34, 1
        %s635 = scalar_lea.vmem %s15, %s634
      $region88: #{bert_text_match_forward.1} parent=31 // pred_fallthru
        _
    $region32: #{bert_text_match_forward.1} parent=5 // pred_fallthru
      _
    %p636 = scmp.le.s32.totalorder 1, %s26
    %p637 = scmp.lt.s32.totalorder %s26, 5
    %p638 = pnand %p636, %p637
    %p639 = pneg %p638
    // Predicated region
    $region89: #{bert_text_match_forward.1} parent=5 // pred_check
      _
    $region90: #{bert_text_match_forward.1} parent=5 // pred_check_branch
      %641 = sbr.rel (%p638) target = $region92
    $region91: #{bert_text_match_forward.1} parent=5 // pred_region
      %s642 = ssub.s32 %s26, 1
      %p643 = scmp.lt.s32.totalorder %s35, 1
      %s644 = scalar_select %p643, %s35, 1
      %s645 = smul.addr %s644, 8
      %s646 = scalar_lea.vmem %s0, %s645
      %p647 = pneg %p64
      %p648 = pneg %p61
      %p649 = scmp.lt.s32.totalorder %s35, 1
      %s650 = scalar_select %p649, %s35, 1
      %s651 = scalar_lea.vmem %s1, %s650
      %p652 = pneg %p90
      %p653 = pneg %p87
      %p654 = pneg %p111
      %p655 = pneg %p108
      %p656 = pneg %p132
      %p657 = pneg %p129
      %p658 = scmp.lt.s32.totalorder %s36, 1
      %s659 = scalar_select %p658, %s36, 1
      %s660 = smul.addr %s659, 4
      %s661 = smul.addr %s660, 8
      %s662 = scalar_lea.vmem %s4, %s661
      %p663 = pneg %p158
      %p664 = pneg %p155
      %p665 = scmp.lt.s32.totalorder %s36, 1
      %s666 = scalar_select %p665, %s36, 1
      %s667 = scalar_lea.vmem %s5, %s666
      %p668 = pneg %p184
      %p669 = pneg %p181
      %p670 = scmp.lt.s32.totalorder %s36, 1
      %s671 = scalar_select %p670, %s36, 1
      %s672 = smul.addr %s671, 4
      %s673 = smul.addr %s672, 8
      %s674 = scalar_lea.vmem %s6, %s673
      %p675 = pneg %p210
      %p676 = pneg %p207
      %p677 = scmp.lt.s32.totalorder %s36, 1
      %s678 = scalar_select %p677, %s36, 1
      %s679 = scalar_lea.vmem %s7, %s678
      %p680 = pneg %p236
      %p681 = pneg %p233
      %p682 = scmp.lt.s32.totalorder %s36, 1
      %s683 = scalar_select %p682, %s36, 1
      %s684 = scalar_lea.vmem %s8, %s683
      %p685 = pneg %p262
      %p686 = pneg %p259
      %p687 = scmp.lt.s32.totalorder %s36, 1
      %s688 = scalar_select %p687, %s36, 1
      %s689 = scalar_lea.vmem %s9, %s688
      %p690 = pneg %p288
      %p691 = pneg %p285
      %p692 = scmp.lt.s32.totalorder %s36, 1
      %s693 = scalar_select %p692, %s36, 1
      %s694 = smul.addr %s693, 4
      %s695 = smul.addr %s694, 8
      %s696 = scalar_lea.vmem %s10, %s695
      %p697 = pneg %p314
      %p698 = pneg %p311
      %p699 = scmp.lt.s32.totalorder %s36, 1
      %s700 = scalar_select %p699, %s36, 1
      %s701 = scalar_lea.vmem %s11, %s700
      %p702 = pneg %p340
      %p703 = pneg %p337
      %p704 = scmp.lt.s32.totalorder %s36, 1
      %s705 = scalar_select %p704, %s36, 1
      %s706 = smul.addr %s705, 8
      %s707 = smul.addr %s706, 8
      %s708 = scalar_lea.vmem %s12, %s707
      %p709 = pneg %p366
      %p710 = pneg %p363
      %p711 = scmp.lt.s32.totalorder %s36, 1
      %s712 = scalar_select %p711, %s36, 1
      %s713 = scalar_lea.vmem %s13, %s712
      %p714 = pneg %p392
      %p715 = pneg %p389
      %p716 = scmp.lt.s32.totalorder %s36, 1
      %s717 = scalar_select %p716, %s36, 1
      %s718 = scalar_lea.vmem %s14, %s717
      %p719 = pneg %p418
      %p720 = pneg %p415
      %p721 = scmp.lt.s32.totalorder %s36, 1
      %s722 = scalar_select %p721, %s36, 1
      %s723 = scalar_lea.vmem %s15, %s722
      %p724 = pneg %p444
      %p725 = pneg %p441
      %p726 = pneg %p465
      %p727 = pneg %p462
      %p728 = pneg %p486
      %p729 = pneg %p483
      %p730 = pneg %p512
      %p731 = pneg %p509
      %p732 = scmp.lt.s32.totalorder %s35, 1
      %s733 = scalar_select %p732, %s35, 1
      %s734 = scalar_lea.vmem %s18, %s733
      %p735 = scmp.lt.s32.totalorder %s35, 1
      %s736 = scalar_select %p735, %s35, 1
      %s737 = smul.addr %s736, 8
      %s738 = scalar_lea.vmem %s0, %s737
      %p739 = scmp.lt.s32.totalorder %s35, 1
      %s740 = scalar_select %p739, %s35, 1
      %s741 = scalar_lea.vmem %s1, %s740
      %p742 = scmp.lt.s32.totalorder %s36, 1
      %s743 = scalar_select %p742, %s36, 1
      %s744 = smul.addr %s743, 4
      %s745 = smul.addr %s744, 8
      %s746 = scalar_lea.vmem %s4, %s745
      %p747 = scmp.lt.s32.totalorder %s36, 1
      %s748 = scalar_select %p747, %s36, 1
      %s749 = scalar_lea.vmem %s5, %s748
      %p750 = scmp.lt.s32.totalorder %s36, 1
      %s751 = scalar_select %p750, %s36, 1
      %s752 = smul.addr %s751, 4
      %s753 = smul.addr %s752, 8
      %s754 = scalar_lea.vmem %s6, %s753
      %p755 = scmp.lt.s32.totalorder %s36, 1
      %s756 = scalar_select %p755, %s36, 1
      %s757 = scalar_lea.vmem %s7, %s756
      %p758 = scmp.lt.s32.totalorder %s36, 1
      %s759 = scalar_select %p758, %s36, 1
      %s760 = scalar_lea.vmem %s8, %s759
      %p761 = scmp.lt.s32.totalorder %s36, 1
      %s762 = scalar_select %p761, %s36, 1
      %s763 = scalar_lea.vmem %s9, %s762
      %p764 = scmp.lt.s32.totalorder %s36, 1
      %s765 = scalar_select %p764, %s36, 1
      %s766 = smul.addr %s765, 4
      %s767 = smul.addr %s766, 8
      %s768 = scalar_lea.vmem %s10, %s767
      %p769 = scmp.lt.s32.totalorder %s36, 1
      %s770 = scalar_select %p769, %s36, 1
      %s771 = scalar_lea.vmem %s11, %s770
      %p772 = scmp.lt.s32.totalorder %s36, 1
      %s773 = scalar_select %p772, %s36, 1
      %s774 = smul.addr %s773, 8
      %s775 = smul.addr %s774, 8
      %s776 = scalar_lea.vmem %s12, %s775
      %p777 = scmp.lt.s32.totalorder %s36, 1
      %s778 = scalar_select %p777, %s36, 1
      %s779 = scalar_lea.vmem %s13, %s778
      %p780 = scmp.lt.s32.totalorder %s36, 1
      %s781 = scalar_select %p780, %s36, 1
      %s782 = scalar_lea.vmem %s14, %s781
      %p783 = scmp.lt.s32.totalorder %s36, 1
      %s784 = scalar_select %p783, %s36, 1
      %s785 = scalar_lea.vmem %s15, %s784
      %p786 = scmp.lt.s32.totalorder %s35, 1
      %s787 = scalar_select %p786, %s35, 1
      %s788 = scalar_lea.vmem %s18, %s787
      %p789 = scmp.eq.s32.totalorder %s36, 0
      // Predicated region
      $region93: #{bert_text_match_forward.1} parent=91 // pred_check
        %p790 = pneg %p789
      $region94: #{bert_text_match_forward.1} parent=91 // pred_check_branch
        %792 = sbr.rel (%p790) target = $region96
      $region95: #{bert_text_match_forward.1} parent=91 // pred_region
        %v793 = vld [vmem:[%s738] sm:$0xff]
        %v794 = vld [vmem:[%s2] sm:$0x1]
        %v795 = vld [vmem:[%s3] sm:$0x1]
        %vm796 = vcmask 261120
        %v797 = vsel %vm796, %v793, 0.0
        %798 = vadd.xlane.f32.xlu0 %v797
        %v799 = vpop.xlane.xlu0 %798
        %v800 = vrcp.pop 32.0
        %v801 = vmul.f32 %v799, %v800
        %v802 = vsub.f32 %v793, %v801
        %v803 = vmul.f32 %v802, %v802
        %v804 = vsel %vm796, %v803, 0.0
        %805 = vadd.xlane.f32.xlu0 %v804
        %v806 = vpop.xlane.xlu0 %805
        %v807 = vmul.f32 %v806, %v800
        %v808 = vadd.f32 %v807, 1e-12
        %v809 = vrsqrt.pop %v808
        %v810 = vmul.f32 %v802, %v809
        %v812 = vlaneseq
        %v813 = vshrl.u32 %v812, 7
        %v814 = vsub.s32 0, %v813
        %v815 = vrot.slane %v794, %v814
        %v817 = vmul.f32 %v810, %v815
        %v819 = vlaneseq
        %v820 = vshrl.u32 %v819, 7
        %v821 = vsub.s32 0, %v820
        %v822 = vrot.slane %v795, %v821
        %v824 = vadd.f32 %v817, %v822
        %825 = vst.msk [vmem:[#allocation2] sm:$0xff] %vm796, %v824
      $region96: #{bert_text_match_forward.1} parent=91 // pred_fallthru
        _
      %v826 = vld [vmem:[#allocation2] sm:$0xff]
      %v827 = vld [vmem:[%s746] sm:$0xff]
      %v828 = vld [vmem:[%s746 + $0x8] sm:$0xff]
      %v829 = vld [vmem:[%s746 + $0x10] sm:$0xff]
      %v830 = vld [vmem:[%s746 + $0x18] sm:$0xff]
      %v831 = vld [vmem:[%s749] sm:$0x1]
      %v833 = vlaneseq
      %v834 = vshrl.u32 %v833, 7
      %v835 = vsub.s32 0, %v834
      %v836 = vrot.slane %v831, %v835
      %vm838 = vcmask 261120
      %v840 = vsel %vm838, %v826, 0
      %842 = vmatprep.subr.mxu0 0.0
      %843 = vmatpush1.msra.mxu0 %v827
      %844 = vmatprep.subr.mxu0 0.0
      %845 = vmatpush1.msra.mxu0 %v828
      %846 = vmatprep.subr.mxu0 0.0
      %847 = vmatpush1.msra.mxu0 %v829
      %848 = vmatprep.subr.mxu0 0.0
      %849 = vmatpush1.msra.mxu0 %v830
      %850 = vmatprep.subr.mxu0 0.0
      %851 = vmatpush1.msra.mxu0 0.0
      %852 = vmatprep.subr.mxu0 0.0
      %853 = vmatpush1.msra.mxu0 0.0
      %854 = vmatprep.subr.mxu0 0.0
      %855 = vmatpush1.msra.mxu0 0.0
      %856 = vmatprep.subr.mxu0 0.0
      %857 = vmatpush1.msra.mxu0 0.0
      %858 = vmatprep.subr.mxu0 0.0
      %859 = vmatpush1.msra.mxu0 0.0
      %860 = vmatprep.subr.mxu0 0.0
      %861 = vmatpush1.msra.mxu0 0.0
      %862 = vmatprep.subr.mxu0 0.0
      %863 = vmatpush1.msra.mxu0 0.0
      %864 = vmatprep.subr.mxu0 0.0
      %865 = vmatpush1.msra.mxu0 0.0
      %866 = vmatprep.subr.mxu0 0.0
      %867 = vmatpush1.msra.mxu0 0.0
      %868 = vmatprep.subr.mxu0 0.0
      %869 = vmatpush1.msra.mxu0 0.0
      %870 = vmatprep.subr.mxu0 0.0
      %871 = vmatpush1.msra.mxu0 0.0
      %872 = vmatprep.subr.mxu0 0.0
      %873 = vmatpush1.msra.mxu0 0.0
      %874 = vmatprep.subr.mxu0 0.0
      %875 = vmatpush1.msra.mxu0 0.0
      %876 = vmatprep.subr.mxu0 0.0
      %877 = vmatpush1.msra.mxu0 0.0
      %878 = vmatprep.subr.mxu0 0.0
      %879 = vmatpush1.msra.mxu0 0.0
      %880 = vmatprep.subr.mxu0 0.0
      %881 = vmatpush1.msra.mxu0 0.0
      %882 = vmatprep.subr.mxu0 0.0
      %883 = vmatpush1.msra.mxu0 0.0
      %884 = vmatprep.subr.mxu0 0.0
      %885 = vmatpush1.msra.mxu0 0.0
      %886 = vmatprep.subr.mxu0 0.0
      %887 = vmatpush1.msra.mxu0 0.0
      %888 = vmatprep.subr.mxu0 0.0
      %889 = vmatpush1.msra.mxu0 0.0
      %890 = vmatprep.subr.mxu0 0.0
      %891 = vmatpush1.msra.mxu0 0.0
      %892 = vmatprep.subr.mxu0 0.0
      %893 = vmatpush1.msra.mxu0 0.0
      %894 = vmatprep.subr.mxu0 0.0
      %895 = vmatpush1.msra.mxu0 0.0
      %896 = vmatprep.subr.mxu0 0.0
      %897 = vmatpush1.msra.mxu0 0.0
      %898 = vmatprep.subr.mxu0 0.0
      %899 = vmatpush1.msra.mxu0 0.0
      %900 = vmatprep.subr.mxu0 0.0
      %901 = vmatpush1.msra.mxu0 0.0
      %902 = vmatprep.subr.mxu0 0.0
      %903 = vmatpush1.msra.mxu0 0.0
      %904 = vmatprep.subr.mxu0 0.0
      %905 = vmatpush1.msra.mxu0 0.0
      %906 = vmatprep.mubr.f32.mxu0 0.0
      %907 = vmatmul.mubr.f32.gmra.mrb[0].mxu0 %v840
      %v908 = vpop.f32.mrb[0].mxu0
      %v909 = vadd.f32 %v836, %v908
      %v910 = vpop.f32.mrb[0].mxu0
      %911 = vdwg.mxu0
      %v912 = vld [vmem:[%s741] sm:$0x1]
      %914 = vrot.lane.b32.xlu0 %v909, 96
      %v915 = vpop.permute.xlu0 %914
      %vm916 = vcmask 130048
      %v917 = vsel %vm916, %v909, 0
      %v919 = vsel %vm916, %v915, 0
      %921 = vmatprep.subr.mxu0 0.0
      %922 = vmatpush1.xpose.msra.mxu0 %v919
      %923 = vmatprep.subr.mxu0 0.0
      %924 = vmatpush1.xpose.msra.mxu0 0.0
      %925 = vmatprep.subr.mxu0 0.0
      %926 = vmatpush1.xpose.msra.mxu0 0.0
      %927 = vmatprep.subr.mxu0 0.0
      %928 = vmatpush1.xpose.msra.mxu0 0.0
      %929 = vmatprep.subr.mxu0 0.0
      %930 = vmatpush1.xpose.msra.mxu0 0.0
      %931 = vmatprep.subr.mxu0 0.0
      %932 = vmatpush1.xpose.msra.mxu0 0.0
      %933 = vmatprep.subr.mxu0 0.0
      %934 = vmatpush1.xpose.msra.mxu0 0.0
      %935 = vmatprep.subr.mxu0 0.0
      %936 = vmatpush1.xpose.msra.mxu0 0.0
      %937 = vmatprep.subr.mxu0 0.0
      %938 = vmatpush1.xpose.msra.mxu0 0.0
      %939 = vmatprep.subr.mxu0 0.0
      %940 = vmatpush1.xpose.msra.mxu0 0.0
      %941 = vmatprep.subr.mxu0 0.0
      %942 = vmatpush1.xpose.msra.mxu0 0.0
      %943 = vmatprep.subr.mxu0 0.0
      %944 = vmatpush1.xpose.msra.mxu0 0.0
      %945 = vmatprep.subr.mxu0 0.0
      %946 = vmatpush1.xpose.msra.mxu0 0.0
      %947 = vmatprep.subr.mxu0 0.0
      %948 = vmatpush1.xpose.msra.mxu0 0.0
      %949 = vmatprep.subr.mxu0 0.0
      %950 = vmatpush1.xpose.msra.mxu0 0.0
      %951 = vmatprep.subr.mxu0 0.0
      %952 = vmatpush1.xpose.msra.mxu0 0.0
      %953 = vmatprep.subr.mxu0 0.0
      %954 = vmatpush1.xpose.msra.mxu0 0.0
      %955 = vmatprep.subr.mxu0 0.0
      %956 = vmatpush1.xpose.msra.mxu0 0.0
      %957 = vmatprep.subr.mxu0 0.0
      %958 = vmatpush1.xpose.msra.mxu0 0.0
      %959 = vmatprep.subr.mxu0 0.0
      %960 = vmatpush1.xpose.msra.mxu0 0.0
      %961 = vmatprep.subr.mxu0 0.0
      %962 = vmatpush1.xpose.msra.mxu0 0.0
      %963 = vmatprep.subr.mxu0 0.0
      %964 = vmatpush1.xpose.msra.mxu0 0.0
      %965 = vmatprep.subr.mxu0 0.0
      %966 = vmatpush1.xpose.msra.mxu0 0.0
      %967 = vmatprep.subr.mxu0 0.0
      %968 = vmatpush1.xpose.msra.mxu0 0.0
      %969 = vmatprep.subr.mxu0 0.0
      %970 = vmatpush1.xpose.msra.mxu0 0.0
      %971 = vmatprep.subr.mxu0 0.0
      %972 = vmatpush1.xpose.msra.mxu0 0.0
      %973 = vmatprep.subr.mxu0 0.0
      %974 = vmatpush1.xpose.msra.mxu0 0.0
      %975 = vmatprep.subr.mxu0 0.0
      %976 = vmatpush1.xpose.msra.mxu0 0.0
      %977 = vmatprep.subr.mxu0 0.0
      %978 = vmatpush1.xpose.msra.mxu0 0.0
      %979 = vmatprep.subr.mxu0 0.0
      %980 = vmatpush1.xpose.msra.mxu0 0.0
      %981 = vmatprep.subr.mxu0 0.0
      %982 = vmatpush1.xpose.msra.mxu0 0.0
      %983 = vmatprep.subr.mxu0 0.0
      %984 = vmatpush1.xpose.msra.mxu0 0.0
      %985 = vmatprep.mubr.f32.mxu0 0.0
      %986 = vmatmul.mubr.f32.gmra.mrb[0].mxu0 %v917
      %v987 = vpop.f32.mrb[0].mxu0
      %v988 = vadd.f32 0.0, %v987
      %v989 = vpop.f32.mrb[0].mxu0
      %990 = vdwg.mxu0
      %v991 = vmul.f32 %v988, 0.25
      %v993 = vlaneseq
      %v994 = vshrl.u32 %v993, 7
      %v995 = vsub.s32 0, %v994
      %v996 = vrot.slane %v912, %v995
      %v998 = vadd.f32 %v991, %v996
      %vm999 = vcmask 64512
      %v1000 = vsel %vm999, %v998, -inf
      %1001 = vmax.xlane.f32.xlu0 %v1000
      %v1002 = vpop.xlane.xlu0 %1001
      %v1003 = vsub.f32 %v998, %v1002
      %v1004 = vmul.f32 %v1003, 1.442695
      %v1005 = vpow.pop %v1004
      %v1006 = vsel %vm999, %v1005, 0.0
      %1007 = vadd.xlane.f32.xlu0 %v1006
      %v1008 = vpop.xlane.xlu0 %1007
      %v1009 = vrcp.pop %v1008
      %v1010 = vmul.f32 %v1005, %v1009
      %1011 = vrot.lane.b32.xlu0 %v909, 64
      %v1012 = vpop.permute.xlu0 %1011
      %v1015 = vsel %vm999, %v1010, 0
      %1017 = vmatprep.subr.mxu0 0.0
      %1018 = vmatpush1.msra.mxu0 %v1012
      %1019 = vmatprep.subr.mxu0 0.0
      %1020 = vmatpush1.msra.mxu0 0.0
      %1021 = vmatprep.subr.mxu0 0.0
      %1022 = vmatpush1.msra.mxu0 0.0
      %1023 = vmatprep.subr.mxu0 0.0
      %1024 = vmatpush1.msra.mxu0 0.0
      %1025 = vmatprep.subr.mxu0 0.0
      %1026 = vmatpush1.msra.mxu0 0.0
      %1027 = vmatprep.subr.mxu0 0.0
      %1028 = vmatpush1.msra.mxu0 0.0
      %1029 = vmatprep.subr.mxu0 0.0
      %1030 = vmatpush1.msra.mxu0 0.0
      %1031 = vmatprep.subr.mxu0 0.0
      %1032 = vmatpush1.msra.mxu0 0.0
      %1033 = vmatprep.subr.mxu0 0.0
      %1034 = vmatpush1.msra.mxu0 0.0
      %1035 = vmatprep.subr.mxu0 0.0
      %1036 = vmatpush1.msra.mxu0 0.0
      %1037 = vmatprep.subr.mxu0 0.0
      %1038 = vmatpush1.msra.mxu0 0.0
      %1039 = vmatprep.subr.mxu0 0.0
      %1040 = vmatpush1.msra.mxu0 0.0
      %1041 = vmatprep.subr.mxu0 0.0
      %1042 = vmatpush1.msra.mxu0 0.0
      %1043 = vmatprep.subr.mxu0 0.0
      %1044 = vmatpush1.msra.mxu0 0.0
      %1045 = vmatprep.subr.mxu0 0.0
      %1046 = vmatpush1.msra.mxu0 0.0
      %1047 = vmatprep.subr.mxu0 0.0
      %1048 = vmatpush1.msra.mxu0 0.0
      %1049 = vmatprep.subr.mxu0 0.0
      %1050 = vmatpush1.msra.mxu0 0.0
      %1051 = vmatprep.subr.mxu0 0.0
      %1052 = vmatpush1.msra.mxu0 0.0
      %1053 = vmatprep.subr.mxu0 0.0
      %1054 = vmatpush1.msra.mxu0 0.0
      %1055 = vmatprep.subr.mxu0 0.0
      %1056 = vmatpush1.msra.mxu0 0.0
      %1057 = vmatprep.subr.mxu0 0.0
      %1058 = vmatpush1.msra.mxu0 0.0
      %1059 = vmatprep.subr.mxu0 0.0
      %1060 = vmatpush1.msra.mxu0 0.0
      %1061 = vmatprep.subr.mxu0 0.0
      %1062 = vmatpush1.msra.mxu0 0.0
      %1063 = vmatprep.subr.mxu0 0.0
      %1064 = vmatpush1.msra.mxu0 0.0
      %1065 = vmatprep.subr.mxu0 0.0
      %1066 = vmatpush1.msra.mxu0 0.0
      %1067 = vmatprep.subr.mxu0 0.0
      %1068 = vmatpush1.msra.mxu0 0.0
      %1069 = vmatprep.subr.mxu0 0.0
      %1070 = vmatpush1.msra.mxu0 0.0
      %1071 = vmatprep.subr.mxu0 0.0
      %1072 = vmatpush1.msra.mxu0 0.0
      %1073 = vmatprep.subr.mxu0 0.0
      %1074 = vmatpush1.msra.mxu0 0.0
      %1075 = vmatprep.subr.mxu0 0.0
      %1076 = vmatpush1.msra.mxu0 0.0
      %1077 = vmatprep.subr.mxu0 0.0
      %1078 = vmatpush1.msra.mxu0 0.0
      %1079 = vmatprep.subr.mxu0 0.0
      %1080 = vmatpush1.msra.mxu0 0.0
      %1081 = vmatprep.mubr.f32.mxu0 0.0
      %1082 = vmatmul.mubr.f32.gmra.mrb[0].mxu0 %v1015
      %v1083 = vpop.f32.mrb[0].mxu0
      %v1084 = vadd.f32 0.0, %v1083
      %v1085 = vpop.f32.mrb[0].mxu0
      %1086 = vdwg.mxu0
      %1087 = vrot.lane.b32.xlu0 %v909, 112
      %v1088 = vpop.permute.xlu0 %1087
      %1089 = vrot.lane.b32.xlu0 %v909, 80
      %v1090 = vpop.permute.xlu0 %1089
      %v1091 = vsel %vm916, %v1088, 0
      %v1093 = vsel %vm916, %v1090, 0
      %1095 = vmatprep.subr.mxu0 0.0
      %1096 = vmatpush1.xpose.msra.mxu0 %v1093
      %1097 = vmatprep.subr.mxu0 0.0
      %1098 = vmatpush1.xpose.msra.mxu0 0.0
      %1099 = vmatprep.subr.mxu0 0.0
      %1100 = vmatpush1.xpose.msra.mxu0 0.0
      %1101 = vmatprep.subr.mxu0 0.0
      %1102 = vmatpush1.xpose.msra.mxu0 0.0
      %1103 = vmatprep.subr.mxu0 0.0
      %1104 = vmatpush1.xpose.msra.mxu0 0.0
      %1105 = vmatprep.subr.mxu0 0.0
      %1106 = vmatpush1.xpose.msra.mxu0 0.0
      %1107 = vmatprep.subr.mxu0 0.0
      %1108 = vmatpush1.xpose.msra.mxu0 0.0
      %1109 = vmatprep.subr.mxu0 0.0
      %1110 = vmatpush1.xpose.msra.mxu0 0.0
      %1111 = vmatprep.subr.mxu0 0.0
      %1112 = vmatpush1.xpose.msra.mxu0 0.0
      %1113 = vmatprep.subr.mxu0 0.0
      %1114 = vmatpush1.xpose.msra.mxu0 0.0
      %1115 = vmatprep.subr.mxu0 0.0
      %1116 = vmatpush1.xpose.msra.mxu0 0.0
      %1117 = vmatprep.subr.mxu0 0.0
      %1118 = vmatpush1.xpose.msra.mxu0 0.0
      %1119 = vmatprep.subr.mxu0 0.0
      %1120 = vmatpush1.xpose.msra.mxu0 0.0
      %1121 = vmatprep.subr.mxu0 0.0
      %1122 = vmatpush1.xpose.msra.mxu0 0.0
      %1123 = vmatprep.subr.mxu0 0.0
      %1124 = vmatpush1.xpose.msra.mxu0 0.0
      %1125 = vmatprep.subr.mxu0 0.0
      %1126 = vmatpush1.xpose.msra.mxu0 0.0
      %1127 = vmatprep.subr.mxu0 0.0
      %1128 = vmatpush1.xpose.msra.mxu0 0.0
      %1129 = vmatprep.subr.mxu0 0.0
      %1130 = vmatpush1.xpose.msra.mxu0 0.0
      %1131 = vmatprep.subr.mxu0 0.0
      %1132 = vmatpush1.xpose.msra.mxu0 0.0
      %1133 = vmatprep.subr.mxu0 0.0
      %1134 = vmatpush1.xpose.msra.mxu0 0.0
      %1135 = vmatprep.subr.mxu0 0.0
      %1136 = vmatpush1.xpose.msra.mxu0 0.0
      %1137 = vmatprep.subr.mxu0 0.0
      %1138 = vmatpush1.xpose.msra.mxu0 0.0
      %1139 = vmatprep.subr.mxu0 0.0
      %1140 = vmatpush1.xpose.msra.mxu0 0.0
      %1141 = vmatprep.subr.mxu0 0.0
      %1142 = vmatpush1.xpose.msra.mxu0 0.0
      %1143 = vmatprep.subr.mxu0 0.0
      %1144 = vmatpush1.xpose.msra.mxu0 0.0
      %1145 = vmatprep.subr.mxu0 0.0
      %1146 = vmatpush1.xpose.msra.mxu0 0.0
      %1147 = vmatprep.subr.mxu0 0.0
      %1148 = vmatpush1.xpose.msra.mxu0 0.0
      %1149 = vmatprep.subr.mxu0 0.0
      %1150 = vmatpush1.xpose.msra.mxu0 0.0
      %1151 = vmatprep.subr.mxu0 0.0
      %1152 = vmatpush1.xpose.msra.mxu0 0.0
      %1153 = vmatprep.subr.mxu0 0.0
      %1154 = vmatpush1.xpose.msra.mxu0 0.0
      %1155 = vmatprep.subr.mxu0 0.0
      %1156 = vmatpush1.xpose.msra.mxu0 0.0
      %1157 = vmatprep.subr.mxu0 0.0
      %1158 = vmatpush1.xpose.msra.mxu0 0.0
      %1159 = vmatprep.mubr.f32.mxu0 0.0
      %1160 = vmatmul.mubr.f32.gmra.mrb[0].mxu0 %v1091
      %v1161 = vpop.f32.mrb[0].mxu0
      %v1162 = vadd.f32 0.0, %v1161
      %v1163 = vpop.f32.mrb[0].mxu0
      %1164 = vdwg.mxu0
      %v1165 = vmul.f32 %v1162, 0.25
      %v1166 = vadd.f32 %v1165, %v996
      %v1167 = vsel %vm999, %v1166, -inf
      %1168 = vmax.xlane.f32.xlu0 %v1167
      %v1169 = vpop.xlane.xlu0 %1168
      %v1170 = vsub.f32 %v1166, %v1169
      %v1171 = vmul.f32 %v1170, 1.442695
      %v1172 = vpow.pop %v1171
      %v1173 = vsel %vm999, %v1172, 0.0
      %1174 = vadd.xlane.f32.xlu0 %v1173
      %v1175 = vpop.xlane.xlu0 %1174
      %v1176 = vrcp.pop %v1175
      %v1177 = vmul.f32 %v1172, %v1176
      %1178 = vrot.lane.b32.xlu0 %v909, 48
      %v1179 = vpop.permute.xlu0 %1178
      %v1182 = vsel %vm999, %v1177, 0
      %1184 = vmatprep.subr.mxu0 0.0
      %1185 = vmatpush1.msra.mxu0 %v1179
      %1186 = vmatprep.subr.mxu0 0.0
      %1187 = vmatpush1.msra.mxu0 0.0
      %1188 = vmatprep.subr.mxu0 0.0
      %1189 = vmatpush1.msra.mxu0 0.0
      %1190 = vmatprep.subr.mxu0 0.0
      %1191 = vmatpush1.msra.mxu0 0.0
      %1192 = vmatprep.subr.mxu0 0.0
      %1193 = vmatpush1.msra.mxu0 0.0
      %1194 = vmatprep.subr.mxu0 0.0
      %1195 = vmatpush1.msra.mxu0 0.0
      %1196 = vmatprep.subr.mxu0 0.0
      %1197 = vmatpush1.msra.mxu0 0.0
      %1198 = vmatprep.subr.mxu0 0.0
      %1199 = vmatpush1.msra.mxu0 0.0
      %1200 = vmatprep.subr.mxu0 0.0
      %1201 = vmatpush1.msra.mxu0 0.0
      %1202 = vmatprep.subr.mxu0 0.0
      %1203 = vmatpush1.msra.mxu0 0.0
      %1204 = vmatprep.subr.mxu0 0.0
      %1205 = vmatpush1.msra.mxu0 0.0
      %1206 = vmatprep.subr.mxu0 0.0
      %1207 = vmatpush1.msra.mxu0 0.0
      %1208 = vmatprep.subr.mxu0 0.0
      %1209 = vmatpush1.msra.mxu0 0.0
      %1210 = vmatprep.subr.mxu0 0.0
      %1211 = vmatpush1.msra.mxu0 0.0
      %1212 = vmatprep.subr.mxu0 0.0
      %1213 = vmatpush1.msra.mxu0 0.0
      %1214 = vmatprep.subr.mxu0 0.0
      %1215 = vmatpush1.msra.mxu0 0.0
      %1216 = vmatprep.subr.mxu0 0.0
      %1217 = vmatpush1.msra.mxu0 0.0
      %1218 = vmatprep.subr.mxu0 0.0
      %1219 = vmatpush1.msra.mxu0 0.0
      %1220 = vmatprep.subr.mxu0 0.0
      %1221 = vmatpush1.msra.mxu0 0.0
      %1222 = vmatprep.subr.mxu0 0.0
      %1223 = vmatpush1.msra.mxu0 0.0
      %1224 = vmatprep.subr.mxu0 0.0
      %1225 = vmatpush1.msra.mxu0 0.0
      %1226 = vmatprep.subr.mxu0 0.0
      %1227 = vmatpush1.msra.mxu0 0.0
      %1228 = vmatprep.subr.mxu0 0.0
      %1229 = vmatpush1.msra.mxu0 0.0
      %1230 = vmatprep.subr.mxu0 0.0
      %1231 = vmatpush1.msra.mxu0 0.0
      %1232 = vmatprep.subr.mxu0 0.0
      %1233 = vmatpush1.msra.mxu0 0.0
      %1234 = vmatprep.subr.mxu0 0.0
      %1235 = vmatpush1.msra.mxu0 0.0
      %1236 = vmatprep.subr.mxu0 0.0
      %1237 = vmatpush1.msra.mxu0 0.0
      %1238 = vmatprep.subr.mxu0 0.0
      %1239 = vmatpush1.msra.mxu0 0.0
      %1240 = vmatprep.subr.mxu0 0.0
      %1241 = vmatpush1.msra.mxu0 0.0
      %1242 = vmatprep.subr.mxu0 0.0
      %1243 = vmatpush1.msra.mxu0 0.0
      %1244 = vmatprep.subr.mxu0 0.0
      %1245 = vmatpush1.msra.mxu0 0.0
      %1246 = vmatprep.subr.mxu0 0.0
      %1247 = vmatpush1.msra.mxu0 0.0
      %1248 = vmatprep.mubr.f32.mxu0 0.0
      %1249 = vmatmul.mubr.f32.gmra.mrb[0].mxu0 %v1182
      %v1250 = vpop.f32.mrb[0].mxu0
      %v1251 = vadd.f32 0.0, %v1250
      %v1252 = vpop.f32.mrb[0].mxu0
      %1253 = vdwg.mxu0
      %1255 = vrot.lane.b32.xlu0 %v1251, 16
      %v1256 = vpop.permute.xlu0 %1255
      %v1258 = vsel %vm916, %v1084, %v1256
      %v1259 = vld [vmem:[%s754] sm:$0xff]
      %v1260 = vld [vmem:[%s754 + $0x8] sm:$0xff]
      %v1261 = vld [vmem:[%s754 + $0x10] sm:$0xff]
      %v1262 = vld [vmem:[%s754 + $0x18] sm:$0xff]
      %v1263 = vld [vmem:[%s757] sm:$0x1]
      %v1265 = vlaneseq
      %v1266 = vshrl.u32 %v1265, 7
      %v1267 = vsub.s32 0, %v1266
      %v1268 = vrot.slane %v1263, %v1267
      %v1271 = vsel %vm838, %v1258, 0
      %1273 = vmatprep.subr.mxu0 0.0
      %1274 = vmatpush1.msra.mxu0 %v1259
      %1275 = vmatprep.subr.mxu0 0.0
      %1276 = vmatpush1.msra.mxu0 %v1260
      %1277 = vmatprep.subr.mxu0 0.0
      %1278 = vmatpush1.msra.mxu0 %v1261
      %1279 = vmatprep.subr.mxu0 0.0
      %1280 = vmatpush1.msra.mxu0 %v1262
      %1281 = vmatprep.subr.mxu0 0.0
      %1282 = vmatpush1.msra.mxu0 0.0
      %1283 = vmatprep.subr.mxu0 0.0
      %1284 = vmatpush1.msra.mxu0 0.0
      %1285 = vmatprep.subr.mxu0 0.0
      %1286 = vmatpush1.msra.mxu0 0.0
      %1287 = vmatprep.subr.mxu0 0.0
      %1288 = vmatpush1.msra.mxu0 0.0
      %1289 = vmatprep.subr.mxu0 0.0
      %1290 = vmatpush1.msra.mxu0 0.0
      %1291 = vmatprep.subr.mxu0 0.0
      %1292 = vmatpush1.msra.mxu0 0.0
      %1293 = vmatprep.subr.mxu0 0.0
      %1294 = vmatpush1.msra.mxu0 0.0
      %1295 = vmatprep.subr.mxu0 0.0
      %1296 = vmatpush1.msra.mxu0 0.0
      %1297 = vmatprep.subr.mxu0 0.0
      %1298 = vmatpush1.msra.mxu0 0.0
      %1299 = vmatprep.subr.mxu0 0.0
      %1300 = vmatpush1.msra.mxu0 0.0
      %1301 = vmatprep.subr.mxu0 0.0
      %1302 = vmatpush1.msra.mxu0 0.0
      %1303 = vmatprep.subr.mxu0 0.0
      %1304 = vmatpush1.msra.mxu0 0.0
      %1305 = vmatprep.subr.mxu0 0.0
      %1306 = vmatpush1.msra.mxu0 0.0
      %1307 = vmatprep.subr.mxu0 0.0
      %1308 = vmatpush1.msra.mxu0 0.0
      %1309 = vmatprep.subr.mxu0 0.0
      %1310 = vmatpush1.msra.mxu0 0.0
      %1311 = vmatprep.subr.mxu0 0.0
      %1312 = vmatpush1.msra.mxu0 0.0
      %1313 = vmatprep.subr.mxu0 0.0
      %1314 = vmatpush1.msra.mxu0 0.0
      %1315 = vmatprep.subr.mxu0 0.0
      %1316 = vmatpush1.msra.mxu0 0.0
      %1317 = vmatprep.subr.mxu0 0.0
      %1318 = vmatpush1.msra.mxu0 0.0
      %1319 = vmatprep.subr.mxu0 0.0
      %1320 = vmatpush1.msra.mxu0 0.0
      %1321 = vmatprep.subr.mxu0 0.0
      %1322 = vmatpush1.msra.mxu0 0.0
      %1323 = vmatprep.subr.mxu0 0.0
      %1324 = vmatpush1.msra.mxu0 0.0
      %1325 = vmatprep.subr.mxu0 0.0
      %1326 = vmatpush1.msra.mxu0 0.0
      %1327 = vmatprep.subr.mxu0 0.0
      %1328 = vmatpush1.msra.mxu0 0.0
      %1329 = vmatprep.subr.mxu0 0.0
      %1330 = vmatpush1.msra.mxu0 0.0
      %1331 = vmatprep.subr.mxu0 0.0
      %1332 = vmatpush1.msra.mxu0 0.0
      %1333 = vmatprep.subr.mxu0 0.0
      %1334 = vmatpush1.msra.mxu0 0.0
      %1335 = vmatprep.subr.mxu0 0.0
      %1336 = vmatpush1.msra.mxu0 0.0
      %1337 = vmatprep.mubr.f32.mxu0 0.0
      %1338 = vmatmul.mubr.f32.gmra.mrb[0].mxu0 %v1271
      %v1339 = vpop.f32.mrb[0].mxu0
      %v1340 = vadd.f32 %v1268, %v1339
      %v1341 = vpop.f32.mrb[0].mxu0
      %1342 = vdwg.mxu0
      %v1343 = vadd.f32 %v1340, %v826
      %v1344 = vld [vmem:[%s760] sm:$0x1]
      %v1345 = vld [vmem:[%s763] sm:$0x1]
      %v1346 = vsel %vm838, %v1343, 0.0
      %1347 = vadd.xlane.f32.xlu0 %v1346
      %v1348 = vpop.xlane.xlu0 %1347
      %v1349 = vrcp.pop 32.0
      %v1350 = vmul.f32 %v1348, %v1349
      %v1351 = vsub.f32 %v1343, %v1350
      %v1352 = vmul.f32 %v1351, %v1351
      %v1353 = vsel %vm838, %v1352, 0.0
      %1354 = vadd.xlane.f32.xlu0 %v1353
      %v1355 = vpop.xlane.xlu0 %1354
      %v1356 = vmul.f32 %v1355, %v1349
      %v1357 = vadd.f32 %v1356, 1e-12
      %v1358 = vrsqrt.pop %v1357
      %v1359 = vmul.f32 %v1351, %v1358
      %v1361 = vlaneseq
      %v1362 = vshrl.u32 %v1361, 7
      %v1363 = vsub.s32 0, %v1362
      %v1364 = vrot.slane %v1344, %v1363
      %v1366 = vmul.f32 %v1359, %v1364
      %v1368 = vlaneseq
      %v1369 = vshrl.u32 %v1368, 7
      %v1370 = vsub.s32 0, %v1369
      %v1371 = vrot.slane %v1345, %v1370
      %v1373 = vadd.f32 %v1366, %v1371
      %v1374 = vld [vmem:[%s768] sm:$0xff]
      %v1375 = vld [vmem:[%s768 + $0x8] sm:$0xff]
      %v1376 = vld [vmem:[%s768 + $0x10] sm:$0xff]
      %v1377 = vld [vmem:[%s768 + $0x18] sm:$0xff]
      %v1378 = vld [vmem:[%s771] sm:$0x1]
      %v1380 = vlaneseq
      %v1381 = vshrl.u32 %v1380, 7
      %v1382 = vsub.s32 0, %v1381
      %v1383 = vrot.slane %v1378, %v1382
      %v1386 = vsel %vm838, %v1373, 0
      %1388 = vmatprep.subr.mxu0 0.0
      %1389 = vmatpush1.msra.mxu0 %v1374
      %1390 = vmatprep.subr.mxu0 0.0
      %1391 = vmatpush1.msra.mxu0 %v1375
      %1392 = vmatprep.subr.mxu0 0.0
      %1393 = vmatpush1.msra.mxu0 %v1376
      %1394 = vmatprep.subr.mxu0 0.0
      %1395 = vmatpush1.msra.mxu0 %v1377
      %1396 = vmatprep.subr.mxu0 0.0
      %1397 = vmatpush1.msra.mxu0 0.0
      %1398 = vmatprep.subr.mxu0 0.0
      %1399 = vmatpush1.msra.mxu0 0.0
      %1400 = vmatprep.subr.mxu0 0.0
      %1401 = vmatpush1.msra.mxu0 0.0
      %1402 = vmatprep.subr.mxu0 0.0
      %1403 = vmatpush1.msra.mxu0 0.0
      %1404 = vmatprep.subr.mxu0 0.0
      %1405 = vmatpush1.msra.mxu0 0.0
      %1406 = vmatprep.subr.mxu0 0.0
      %1407 = vmatpush1.msra.mxu0 0.0
      %1408 = vmatprep.subr.mxu0 0.0
      %1409 = vmatpush1.msra.mxu0 0.0
      %1410 = vmatprep.subr.mxu0 0.0
      %1411 = vmatpush1.msra.mxu0 0.0
      %1412 = vmatprep.subr.mxu0 0.0
      %1413 = vmatpush1.msra.mxu0 0.0
      %1414 = vmatprep.subr.mxu0 0.0
      %1415 = vmatpush1.msra.mxu0 0.0
      %1416 = vmatprep.subr.mxu0 0.0
      %1417 = vmatpush1.msra.mxu0 0.0
      %1418 = vmatprep.subr.mxu0 0.0
      %1419 = vmatpush1.msra.mxu0 0.0
      %1420 = vmatprep.subr.mxu0 0.0
      %1421 = vmatpush1.msra.mxu0 0.0
      %1422 = vmatprep.subr.mxu0 0.0
      %1423 = vmatpush1.msra.mxu0 0.0
      %1424 = vmatprep.subr.mxu0 0.0
      %1425 = vmatpush1.msra.mxu0 0.0
      %1426 = vmatprep.subr.mxu0 0.0
      %1427 = vmatpush1.msra.mxu0 0.0
      %1428 = vmatprep.subr.mxu0 0.0
      %1429 = vmatpush1.msra.mxu0 0.0
      %1430 = vmatprep.subr.mxu0 0.0
      %1431 = vmatpush1.msra.mxu0 0.0
      %1432 = vmatprep.subr.mxu0 0.0
      %1433 = vmatpush1.msra.mxu0 0.0
      %1434 = vmatprep.subr.mxu0 0.0
      %1435 = vmatpush1.msra.mxu0 0.0
      %1436 = vmatprep.subr.mxu0 0.0
      %1437 = vmatpush1.msra.mxu0 0.0
      %1438 = vmatprep.subr.mxu0 0.0
      %1439 = vmatpush1.msra.mxu0 0.0
      %1440 = vmatprep.subr.mxu0 0.0
      %1441 = vmatpush1.msra.mxu0 0.0
      %1442 = vmatprep.subr.mxu0 0.0
      %1443 = vmatpush1.msra.mxu0 0.0
      %1444 = vmatprep.subr.mxu0 0.0
      %1445 = vmatpush1.msra.mxu0 0.0
      %1446 = vmatprep.subr.mxu0 0.0
      %1447 = vmatpush1.msra.mxu0 0.0
      %1448 = vmatprep.subr.mxu0 0.0
      %1449 = vmatpush1.msra.mxu0 0.0
      %1450 = vmatprep.subr.mxu0 0.0
      %1451 = vmatpush1.msra.mxu0 0.0
      %1452 = vmatprep.mubr.f32.mxu0 0.0
      %1453 = vmatmul.mubr.f32.gmra.mrb[0].mxu0 %v1386
      %v1454 = vpop.f32.mrb[0].mxu0
      %v1455 = vadd.f32 %v1383, %v1454
      %v1456 = vpop.f32.mrb[0].mxu0
      %1457 = vdwg.mxu0
      %v1458 = vmul.f32 %v1455, %v1455
      %v1459 = vmul.f32 %v1455, %v1458
      %v1460 = vmul.f32 %v1459, 0.044715
      %v1461 = vadd.f32 %v1455, %v1460
      %v1462 = vmul.f32 %v1461, 0.7978846
      %v1463 = vtanh.pop %v1462
      %v1464 = vadd.f32 %v1463, 1.0
      %v1465 = vmul.f32 %v1464, 0.5
      %v1466 = vmul.f32 %v1455, %v1465
      %v1467 = vld [vmem:[%s776] sm:$0xff]
      %v1468 = vld [vmem:[%s776 + $0x8] sm:$0xff]
      %v1469 = vld [vmem:[%s776 + $0x10] sm:$0xff]
      %v1470 = vld [vmem:[%s776 + $0x18] sm:$0xff]
      %v1471 = vld [vmem:[%s776 + $0x20] sm:$0xff]
      %v1472 = vld [vmem:[%s776 + $0x28] sm:$0xff]
      %v1473 = vld [vmem:[%s776 + $0x30] sm:$0xff]
      %v1474 = vld [vmem:[%s776 + $0x38] sm:$0xff]
      %v1475 = vld [vmem:[%s779] sm:$0x1]
      %v1477 = vlaneseq
      %v1478 = vshrl.u32 %v1477, 7
      %v1479 = vsub.s32 0, %v1478
      %v1480 = vrot.slane %v1475, %v1479
      %vm1482 = vcmask 523264
      %v1484 = vsel %vm1482, %v1466, 0
      %1486 = vmatprep.subr.mxu0 0.0
      %1487 = vmatpush1.msra.mxu0 %v1467
      %1488 = vmatprep.subr.mxu0 0.0
      %1489 = vmatpush1.msra.mxu0 %v1468
      %1490 = vmatprep.subr.mxu0 0.0
      %1491 = vmatpush1.msra.mxu0 %v1469
      %1492 = vmatprep.subr.mxu0 0.0
      %1493 = vmatpush1.msra.mxu0 %v1470
      %1494 = vmatprep.subr.mxu0 0.0
      %1495 = vmatpush1.msra.mxu0 %v1471
      %1496 = vmatprep.subr.mxu0 0.0
      %1497 = vmatpush1.msra.mxu0 %v1472
      %1498 = vmatprep.subr.mxu0 0.0
      %1499 = vmatpush1.msra.mxu0 %v1473
      %1500 = vmatprep.subr.mxu0 0.0
      %1501 = vmatpush1.msra.mxu0 %v1474
      %1502 = vmatprep.subr.mxu0 0.0
      %1503 = vmatpush1.msra.mxu0 0.0
      %1504 = vmatprep.subr.mxu0 0.0
      %1505 = vmatpush1.msra.mxu0 0.0
      %1506 = vmatprep.subr.mxu0 0.0
      %1507 = vmatpush1.msra.mxu0 0.0
      %1508 = vmatprep.subr.mxu0 0.0
      %1509 = vmatpush1.msra.mxu0 0.0
      %1510 = vmatprep.subr.mxu0 0.0
      %1511 = vmatpush1.msra.mxu0 0.0
      %1512 = vmatprep.subr.mxu0 0.0
      %1513 = vmatpush1.msra.mxu0 0.0
      %1514 = vmatprep.subr.mxu0 0.0
      %1515 = vmatpush1.msra.mxu0 0.0
      %1516 = vmatprep.subr.mxu0 0.0
      %1517 = vmatpush1.msra.mxu0 0.0
      %1518 = vmatprep.subr.mxu0 0.0
      %1519 = vmatpush1.msra.mxu0 0.0
      %1520 = vmatprep.subr.mxu0 0.0
      %1521 = vmatpush1.msra.mxu0 0.0
      %1522 = vmatprep.subr.mxu0 0.0
      %1523 = vmatpush1.msra.mxu0 0.0
      %1524 = vmatprep.subr.mxu0 0.0
      %1525 = vmatpush1.msra.mxu0 0.0
      %1526 = vmatprep.subr.mxu0 0.0
      %1527 = vmatpush1.msra.mxu0 0.0
      %1528 = vmatprep.subr.mxu0 0.0
      %1529 = vmatpush1.msra.mxu0 0.0
      %1530 = vmatprep.subr.mxu0 0.0
      %1531 = vmatpush1.msra.mxu0 0.0
      %1532 = vmatprep.subr.mxu0 0.0
      %1533 = vmatpush1.msra.mxu0 0.0
      %1534 = vmatprep.subr.mxu0 0.0
      %1535 = vmatpush1.msra.mxu0 0.0
      %1536 = vmatprep.subr.mxu0 0.0
      %1537 = vmatpush1.msra.mxu0 0.0
      %1538 = vmatprep.subr.mxu0 0.0
      %1539 = vmatpush1.msra.mxu0 0.0
      %1540 = vmatprep.subr.mxu0 0.0
      %1541 = vmatpush1.msra.mxu0 0.0
      %1542 = vmatprep.subr.mxu0 0.0
      %1543 = vmatpush1.msra.mxu0 0.0
      %1544 = vmatprep.subr.mxu0 0.0
      %1545 = vmatpush1.msra.mxu0 0.0
      %1546 = vmatprep.subr.mxu0 0.0
      %1547 = vmatpush1.msra.mxu0 0.0
      %1548 = vmatprep.subr.mxu0 0.0
      %1549 = vmatpush1.msra.mxu0 0.0
      %1550 = vmatprep.mubr.f32.mxu0 0.0
      %1551 = vmatmul.mubr.f32.gmra.mrb[0].mxu0 %v1484
      %v1552 = vpop.f32.mrb[0].mxu0
      %v1553 = vadd.f32 %v1480, %v1552
      %v1554 = vpop.f32.mrb[0].mxu0
      %1555 = vdwg.mxu0
      %v1556 = vadd.f32 %v1553, %v1373
      %v1557 = vld [vmem:[%s782] sm:$0x1]
      %v1558 = vld [vmem:[%s785] sm:$0x1]
      %v1559 = vsel %vm838, %v1556, 0.0
      %1560 = vadd.xlane.f32.xlu0 %v1559
      %v1561 = vpop.xlane.xlu0 %1560
      %v1562 = vmul.f32 %v1561, %v1349
      %v1563 = vsub.f32 %v1556, %v1562
      %v1564 = vmul.f32 %v1563, %v1563
      %v1565 = vsel %vm838, %v1564, 0.0
      %1566 = vadd.xlane.f32.xlu0 %v1565
      %v1567 = vpop.xlane.xlu0 %1566
      %v1568 = vmul.f32 %v1567, %v1349
      %v1569 = vadd.f32 %v1568, 1e-12
      %v1570 = vrsqrt.pop %v1569
      %v1571 = vmul.f32 %v1563, %v1570
      %v1573 = vlaneseq
      %v1574 = vshrl.u32 %v1573, 7
      %v1575 = vsub.s32 0, %v1574
      %v1576 = vrot.slane %v1557, %v1575
      %v1578 = vmul.f32 %v1571, %v1576
      %v1580 = vlaneseq
      %v1581 = vshrl.u32 %v1580, 7
      %v1582 = vsub.s32 0, %v1581
      %v1583 = vrot.slane %v1558, %v1582
      %v1585 = vadd.f32 %v1578, %v1583
      %1586 = vst.msk [vmem:[#allocation2] sm:$0xff] %vm838, %v1585
      %p1587 = scmp.eq.s32.totalorder %s36, 1
      // Predicated region
      $region97: #{bert_text_match_forward.1} parent=91 // pred_check
        %p1588 = pneg %p1587
      $region98: #{bert_text_match_forward.1} parent=91 // pred_check_branch
        %1590 = sbr.rel (%p1588) target = $region100
      $region99: #{bert_text_match_forward.1} parent=91 // pred_region
        %v1591 = vld [vmem:[%s16] sm:$0xff]
        %v1592 = vld [vmem:[%s16 + $0x8] sm:$0xff]
        %v1593 = vld [vmem:[%s16 + $0x10] sm:$0xff]
        %v1594 = vld [vmem:[%s16 + $0x18] sm:$0xff]
        %v1595 = vld [vmem:[#allocation3] sm:$0x1]
        %v1597 = vsel %vm838, %v1585, 0
        %1599 = vmatprep.subr.mxu0 0.0
        %1600 = vmatpush1.msra.mxu0 %v1591
        %1601 = vmatprep.subr.mxu0 0.0
        %1602 = vmatpush1.msra.mxu0 %v1592
        %1603 = vmatprep.subr.mxu0 0.0
        %1604 = vmatpush1.msra.mxu0 %v1593
        %1605 = vmatprep.subr.mxu0 0.0
        %1606 = vmatpush1.msra.mxu0 %v1594
        %1607 = vmatprep.subr.mxu0 0.0
        %1608 = vmatpush1.msra.mxu0 0.0
        %1609 = vmatprep.subr.mxu0 0.0
        %1610 = vmatpush1.msra.mxu0 0.0
        %1611 = vmatprep.subr.mxu0 0.0
        %1612 = vmatpush1.msra.mxu0 0.0
        %1613 = vmatprep.subr.mxu0 0.0
        %1614 = vmatpush1.msra.mxu0 0.0
        %1615 = vmatprep.subr.mxu0 0.0
        %1616 = vmatpush1.msra.mxu0 0.0
        %1617 = vmatprep.subr.mxu0 0.0
        %1618 = vmatpush1.msra.mxu0 0.0
        %1619 = vmatprep.subr.mxu0 0.0
        %1620 = vmatpush1.msra.mxu0 0.0
        %1621 = vmatprep.subr.mxu0 0.0
        %1622 = vmatpush1.msra.mxu0 0.0
        %1623 = vmatprep.subr.mxu0 0.0
        %1624 = vmatpush1.msra.mxu0 0.0
        %1625 = vmatprep.subr.mxu0 0.0
        %1626 = vmatpush1.msra.mxu0 0.0
        %1627 = vmatprep.subr.mxu0 0.0
        %1628 = vmatpush1.msra.mxu0 0.0
        %1629 = vmatprep.subr.mxu0 0.0
        %1630 = vmatpush1.msra.mxu0 0.0
        %1631 = vmatprep.subr.mxu0 0.0
        %1632 = vmatpush1.msra.mxu0 0.0
        %1633 = vmatprep.subr.mxu0 0.0
        %1634 = vmatpush1.msra.mxu0 0.0
        %1635 = vmatprep.subr.mxu0 0.0
        %1636 = vmatpush1.msra.mxu0 0.0
        %1637 = vmatprep.subr.mxu0 0.0
        %1638 = vmatpush1.msra.mxu0 0.0
        %1639 = vmatprep.subr.mxu0 0.0
        %1640 = vmatpush1.msra.mxu0 0.0
        %1641 = vmatprep.subr.mxu0 0.0
        %1642 = vmatpush1.msra.mxu0 0.0
        %1643 = vmatprep.subr.mxu0 0.0
        %1644 = vmatpush1.msra.mxu0 0.0
        %1645 = vmatprep.subr.mxu0 0.0
        %1646 = vmatpush1.msra.mxu0 0.0
        %1647 = vmatprep.subr.mxu0 0.0
        %1648 = vmatpush1.msra.mxu0 0.0
        %1649 = vmatprep.subr.mxu0 0.0
        %1650 = vmatpush1.msra.mxu0 0.0
        %1651 = vmatprep.subr.mxu0 0.0
        %1652 = vmatpush1.msra.mxu0 0.0
        %1653 = vmatprep.subr.mxu0 0.0
        %1654 = vmatpush1.msra.mxu0 0.0
        %1655 = vmatprep.subr.mxu0 0.0
        %1656 = vmatpush1.msra.mxu0 0.0
        %1657 = vmatprep.subr.mxu0 0.0
        %1658 = vmatpush1.msra.mxu0 0.0
        %1659 = vmatprep.subr.mxu0 0.0
        %1660 = vmatpush1.msra.mxu0 0.0
        %1661 = vmatprep.subr.mxu0 0.0
        %1662 = vmatpush1.msra.mxu0 0.0
        %1663 = vmatprep.mubr.f32.mxu0 0.0
        %1664 = vmatmul.mubr.f32.gmra.mrb[0].mxu0 %v1597
        %v1665 = vpop.f32.mrb[0].mxu0
        %v1666 = vadd.f32 %v1595, %v1665
        %v1667 = vpop.f32.mrb[0].mxu0
        %1668 = vdwg.mxu0
        %v1669 = vxor.u32 %v1666, 2147483648
        %v1670 = vmul.f32 %v1669, 1.442695
        %v1671 = vpow.pop %v1670
        %v1672 = vadd.f32 %v1671, 1.0
        %v1673 = vrcp.pop %v1672
        %v1674 = vmul.f32 1.0, %v1673
        %vm1675 = vcmask 0
        %1676 = vst.msk [vmem:[%s788] sm:$0x1] %vm1675, %v1674
      $region100: #{bert_text_match_forward.1} parent=91 // pred_fallthru
        _
      %p1677 = scmp.lt.s32.totalorder %s35, 1
      %s1678 = scalar_select %p1677, %s35, 1
      %s1679 = scalar_lea.vmem %s18, %s1678
      // Predicated region
      $region101: #{bert_text_match_forward.1} parent=91 // pred_check
        %p1680 = pneg %p509
      $region102: #{bert_text_match_forward.1} parent=91 // pred_check_branch
        %1682 = sbr.rel (%p1680) target = $region104
      $region103: #{bert_text_match_forward.1} parent=91 // pred_region
        _
      $region104: #{bert_text_match_forward.1} parent=91 // pred_fallthru
        _
    $region92: #{bert_text_match_forward.1} parent=5 // pred_fallthru
      _
    %p1683 = scmp.le.s32.totalorder 2, %s26
    // Predicated region
    $region105: #{bert_text_match_forward.1} parent=5 // pred_check
      %p1684 = pneg %p1683
    $region106: #{bert_text_match_forward.1} parent=5 // pred_check_branch
      %1686 = sbr.rel (%p1684) target = $region108
    $region107: #{bert_text_match_forward.1} parent=5 // pred_region
      %s1687 = ssub.s32 %s26, 2
      // Predicated region
      $region109: #{bert_text_match_forward.1} parent=107 // pred_check
        %p1688 = pneg %p515
      $region110: #{bert_text_match_forward.1} parent=107 // pred_check_branch
        %1690 = sbr.rel (%p1688) target = $region112
      $region111: #{bert_text_match_forward.1} parent=107 // pred_region
        %p1691 = scmp.lt.s32.totalorder %s37, 1
        %s1692 = scalar_select %p1691, %s37, 1
        %s1693 = scalar_lea.vmem %s18, %s1692
      $region112: #{bert_text_match_forward.1} parent=107 // pred_fallthru
        _
    $region108: #{bert_text_match_forward.1} parent=5 // pred_fallthru
      _
  $region6: #{bert_text_match_forward.1} parent=0 // loop_footer
    %s30 = sadd.s32 1, %s26
  $region7: #{bert_text_match_forward.1} parent=0 // loop_footer_branch
    %25 = sbr.rel target = $region3
  $region8: #{bert_text_match_forward.1} parent=0 // loop_exit
    _

</llo_original>
